<compile_context>
chip_gen: v6e
topology: v6e:2x2x1
jax: 0.10.0
libtpu: 0.0.40
codegen_flags: <defaults>
</compile_context>

<pallas_src>
import math
import functools

import jax
import jax.numpy as jnp
from jax import lax
from jax.experimental import pallas as pl
from jax.experimental.pallas import tpu as pltpu

_MASK_FILL = -1000000000.0                 # matches torch masked_fill value
_MASK_RESIDENT_BUDGET = 8 * 1024 * 1024    # max bytes for a VMEM-resident mask
_VMEM_TILE_BUDGET = 20 * 1024 * 1024       # rough per-step VMEM budget (tiles)
_VMEM_LIMIT_BYTES = 48 * 1024 * 1024       # scoped VMEM limit, safe on v5e/v6e/v7x


def _round_up(x, m):
    return ((x + m - 1) // m) * m


def _pick_tile(extent, target, granule):
    """Largest multiple of `granule` that divides `extent` and is <= target."""
    t = min(target, extent)
    t -= t % granule
    for cand in range(t, granule - 1, -granule):
        if extent % cand == 0:
            return cand
    return extent


def _flash_kernel(*refs, scale, mask_mode, kv_valid_len):
    """One (batch*head-group, q-tile, kv-tile) flash-attention step.

    Blocks (head-block batched):
      q_ref: (HB, tq, D)   k_ref/v_ref: (HB, tk, D)   o_ref: (HB, tq, D)
      mask_ref (optional): (MHB, Sq_p, Sk_p) if resident, (MHB, tq, tk) if tiled
    Scratch: m/l (HB, tq, 1) f32, acc (HB, tq, D) f32.
    """
    if mask_mode == "none":
        q_ref, k_ref, v_ref, o_ref, m_scr, l_scr, acc_scr = refs
        mask_ref = None
    else:
        q_ref, k_ref, v_ref, mask_ref, o_ref, m_scr, l_scr, acc_scr = refs

    ki = pl.program_id(2)
    _, tq, _ = q_ref.shape
    tk = k_ref.shape[1]

    @pl.when(ki == 0)
    def _init():
        m_scr[...] = jnp.full_like(m_scr, -jnp.inf)
        l_scr[...] = jnp.zeros_like(l_scr)
        acc_scr[...] = jnp.zeros_like(acc_scr)

    # Fold 1/sqrt(d_k) into Q in Q's native dtype (tq*D mults instead of tq*tk
    # per kv step; keeps bf16 on the fast MXU path).
    q = q_ref[...] * jnp.asarray(scale, dtype=q_ref.dtype)      # (HB, tq, D)
    k = k_ref[...]                                              # (HB, tk, D)

    # score = Q @ K^T, batched over the head block, contracting d_k of both
    # operands -> no explicit K transpose, f32 accumulation on the MXU.
    s = lax.dot_general(
        q, k,
        dimension_numbers=(((2,), (2,)), ((0,), (0,))),
        preferred_element_type=jnp.float32,
    )                                                           # (HB, tq, tk)

    if mask_mode == "resident":
        # Mask block is the full padded (Sq_p, Sk_p) and is DMA'd only when the
        # batch/head block changes; slice the current (tq, tk) tile in VMEM.
        q0 = pl.multiple_of(pl.program_id(1) * tq, 8)
        k0 = pl.multiple_of(ki * tk, 128)
        mvals = mask_ref[:, pl.ds(q0, tq), pl.ds(k0, tk)]       # (MHB, tq, tk)
        s = jnp.where(mvals == 0, jnp.float32(_MASK_FILL), s)
    elif mask_mode == "tiled":
        mvals = mask_ref[...]                                   # (MHB, tq, tk)
        s = jnp.where(mvals == 0, jnp.float32(_MASK_FILL), s)
    elif kv_valid_len is not None:
        # No user mask but Sk was padded up to a multiple of 128: mask out the
        # padded key columns with a cheap in-kernel iota compare.
        col = ki * tk + lax.broadcasted_iota(jnp.int32, (1, 1, tk), 2)
        s = jnp.where(col < kv_valid_len, s, jnp.float32(_MASK_FILL))

    # Online softmax (per head, f32 running max / sum / accumulator).
    m_prev = m_scr[...]
    m_new = jnp.maximum(m_prev, jnp.max(s, axis=-1, keepdims=True))
    alpha = jnp.exp(m_prev - m_new)
    p = jnp.exp(s - m_new)
    l_scr[...] = alpha * l_scr[...] + jnp.sum(p, axis=-1, keepdims=True)
    pv = lax.dot_general(
        p.astype(v_ref.dtype), v_ref[...],
        dimension_numbers=(((2,), (1,)), ((0,), (0,))),
        preferred_element_type=jnp.float32,
    )                                                           # (HB, tq, D)
    acc_scr[...] = alpha * acc_scr[...] + pv
    m_scr[...] = m_new

    @pl.when(ki == pl.num_programs(2) - 1)
    def _finalize():
        # Exact reciprocal for strict f32 parity; approx (free EUP slot) for
        # reduced-precision outputs.
        approx = jnp.dtype(o_ref.dtype) != jnp.dtype(jnp.float32)
        inv_l = pl.reciprocal(l_scr[...], approx=approx)
        o_ref[...] = (acc_scr[...] * inv_l).astype(o_ref.dtype)


@jax.jit
def _self_attention_impl(query, key, value, mask):
    B, H, Sq, D = query.shape
    Sk = key.shape[2]
    scale = 1.0 / math.sqrt(D)
    itemsize = jnp.dtype(query.dtype).itemsize

    # ---- Head blocking: process ~128/d_k heads per grid step ----------------
    target_hb = max(1, min(8, 128 // max(D, 1)))
    hb = 1
    for cand in range(min(H, target_hb), 0, -1):
        if H % cand == 0:
            hb = cand
            break
    hg = H // hb

    # ---- Pad sequences to multiples of 128 (keeps (8,128)-aligned tiles) ----
    sq_p = _round_up(Sq, 128)
    sk_p = _round_up(Sk, 128)

    def pad_seq(x, s_to):
        s = x.shape[2]
        if s_to == s:
            return x
        return jnp.pad(x, ((0, 0), (0, 0), (0, s_to - s), (0, 0)))

    # [B, H, S, D] -> [B*Hg, HB, S_p, D]: pure reshapes, no transposes.
    qr = pad_seq(query, sq_p).reshape(B * hg, hb, sq_p, D)
    kr = pad_seq(key, sk_p).reshape(B * hg, hb, sk_p, D)
    vr = pad_seq(value, sk_p).reshape(B * hg, hb, sk_p, D)

    # ---- Tile sizing: largest dividing tiles, bounded by a VMEM budget ------
    # Bigger tq cuts K/V HBM re-reads (Sq/tq passes) -> go wider for long kv.
    tq_target = 512 if sk_p >= 4096 else 256
    tq = _pick_tile(sq_p, tq_target, 8)      # sublane axis: multiple of 8
    tk = _pick_tile(sk_p, 512, 128)          # lane axis: multiple of 128

    # ---- Mask preprocessing (int8, un-broadcast over batch/head) ------------
    mask_mode = "none"
    mask_arg = None
    mhb = 1
    resident_bytes = 0
    if mask is not None:
        mb, mh = mask.shape[0], mask.shape[1]
        mp = jnp.pad(mask, ((0, 0), (0, 0), (0, sq_p - Sq), (0, sk_p - Sk)))
        if mh > 1:                       # per-head mask
            mask_arg = mp.reshape(mb, hg, hb, sq_p, sk_p)
            mhg, mhb = hg, hb
        else:                            # head-shared mask
            mask_arg = mp.reshape(mb, 1, 1, sq_p, sk_p)
            mhg, mhb = 1, 1
        resident_bytes = 2 * mhb * sq_p * sk_p        # double-buffered int8
        mask_mode = "resident" if resident_bytes <= _MASK_RESIDENT_BUDGET else "tiled"

    # ---- VMEM budgeting (explicit, so larger tiles stay safe on v7x) --------
    def vmem_estimate(tq_, tk_):
        est = 2 * hb * tq_ * D * itemsize            # Q (double buffered)
        est += 2 * 2 * hb * tk_ * D * itemsize       # K, V
        est += 2 * hb * tq_ * D * itemsize           # output
        est += hb * tq_ * (D + 2) * 4                # acc / m / l scratch (f32)
        est += 4 * hb * tq_ * tk_ * 4                # s / p / select temporaries
        if mask_mode == "resident":
            est += resident_bytes
        elif mask_mode == "tiled":
            est += 2 * mhb * tq_ * tk_
        return est

    while vmem_estimate(tq, tk) > _VMEM_TILE_BUDGET and tk > 128:
        tk = _pick_tile(sk_p, tk // 2, 128)
    while vmem_estimate(tq, tk) > _VMEM_TILE_BUDGET and tq > 8:
        tq = _pick_tile(sq_p, max(tq // 2, 8), 8)

    grid = (B * hg, sq_p // tq, sk_p // tk)

    q_spec = pl.BlockSpec((pl.Squeezed(), hb, tq, D), lambda bh, qi, ki: (bh, 0, qi, 0))
    kv_spec = pl.BlockSpec((pl.Squeezed(), hb, tk, D), lambda bh, qi, ki: (bh, 0, ki, 0))
    out_spec = pl.BlockSpec((pl.Squeezed(), hb, tq, D), lambda bh, qi, ki: (bh, 0, qi, 0))

    in_specs = [q_spec, kv_spec, kv_spec]
    args = [qr, kr, vr]
    if mask_mode != "none":
        mb = mask_arg.shape[0]
        mhg = mask_arg.shape[1]
        b_of = (lambda bh: bh // hg) if mb > 1 else (lambda bh: 0)
        h_of = (lambda bh: bh % hg) if mhg > 1 else (lambda bh: 0)
        if mask_mode == "resident":
            # Full (Sq_p, Sk_p) block, index constant over (qi, ki): DMA'd only
            # when the batch/head block changes (once total if fully shared).
            mask_spec = pl.BlockSpec(
                (pl.Squeezed(), pl.Squeezed(), mhb, sq_p, sk_p),
                lambda bh, qi, ki: (b_of(bh), h_of(bh), 0, 0, 0))
        else:
            mask_spec = pl.BlockSpec(
                (pl.Squeezed(), pl.Squeezed(), mhb, tq, tk),
                lambda bh, qi, ki: (b_of(bh), h_of(bh), 0, qi, ki))
        in_specs.append(mask_spec)
        args.append(mask_arg)

    scratch = [
        pltpu.VMEM((hb, tq, 1), jnp.float32),   # running max
        pltpu.VMEM((hb, tq, 1), jnp.float32),   # running sum
        pltpu.VMEM((hb, tq, D), jnp.float32),   # f32 output accumulator
    ]
    compiler_params = pltpu.CompilerParams(
        dimension_semantics=("parallel", "parallel", "arbitrary"),
        vmem_limit_bytes=_VMEM_LIMIT_BYTES,
    )
    out_shape = jax.ShapeDtypeStruct((B * hg, hb, sq_p, D), query.dtype)

    kv_valid_len = Sk if (mask is None and sk_p != Sk) else None
    kernel = functools.partial(
        _flash_kernel, scale=scale, mask_mode=mask_mode, kv_valid_len=kv_valid_len)

    out = pl.pallas_call(
        kernel,
        out_shape=out_shape,
        grid_spec=pltpu.PrefetchScalarGridSpec(
            num_scalar_prefetch=0,
            grid=grid,
            in_specs=in_specs,
            out_specs=out_spec,
            scratch_shapes=scratch,
        ),
        compiler_params=compiler_params,
    )(*args)

    out = out.reshape(B, H, sq_p, D)
    if sq_p != Sq:
        out = out[:, :, :Sq, :]
    return out


def self_attention(query, key, value, mask=None):
    """Pallas equivalent of SelfAttention.forward(query, key, value, mask)."""
    query = jnp.asarray(query)
    key = jnp.asarray(key)
    value = jnp.asarray(value)
    if mask is None:
        return _self_attention_impl(query, key, value, None)

    _, _, Sq, _ = query.shape
    Sk = key.shape[2]
    mask = jnp.asarray(mask)
    if mask.ndim != 4:
        mask = mask.reshape((1,) * (4 - mask.ndim) + mask.shape)
    mb, mh = mask.shape[0], mask.shape[1]
    # Broadcast only the seq dims (needed for tiling); keep batch/head
    # un-broadcast and narrow to int8 to minimize mask HBM traffic.
    mask = jnp.broadcast_to(mask, (mb, mh, Sq, Sk)).astype(jnp.int8)
    return _self_attention_impl(query, key, value, mask)


def _reference(query, key, value, mask=None):
    d_k = key.shape[-1]
    score = jnp.einsum("bhqd,bhkd->bhqk", query, key) / math.sqrt(d_k)
    if mask is not None:
        score = jnp.where(mask == 0, _MASK_FILL, score)
    attn = jax.nn.softmax(score, axis=-1)
    return jnp.einsum("bhqk,bhkd->bhqd", attn, value)


if __name__ == "__main__":
    # Small shapes: batch=2, heads=2, seq=8, d_k=32 -> [B, H, S, d_k]
    B, H, S, D = 2, 2, 8, 32
    key0 = jax.random.PRNGKey(0)
    kq, kk, kv, km = jax.random.split(key0, 4)
    q = jax.random.normal(kq, (B, H, S, D), dtype=jnp.float32)
    k = jax.random.normal(kk, (B, H, S, D), dtype=jnp.float32)
    v = jax.random.normal(kv, (B, H, S, D), dtype=jnp.float32)

    eye = jnp.eye(S, dtype=bool)  # keep at least one valid key per query row
    mask_shared = ((jax.random.uniform(km, (B, 1, S, S)) > 0.3) | eye).astype(jnp.int32)
    mask_perhead = ((jax.random.uniform(km, (B, H, S, S)) > 0.3) | eye).astype(jnp.int32)

    # Unmasked path (f32 inputs; exercises padded-kv in-kernel masking)
    out = jax.block_until_ready(self_attention(q, k, v))
    ref = _reference(q, k, v)
    assert jnp.allclose(out, ref, atol=1e-2, rtol=1e-2), "unmasked mismatch"

    # Head-shared mask ([B, 1, S, S], resident in VMEM)
    out_m = jax.block_until_ready(self_attention(q, k, v, mask_shared))
    ref_m = _reference(q, k, v, mask_shared)
    assert jnp.allclose(out_m, ref_m, atol=1e-2, rtol=1e-2), "masked mismatch"

    # Per-head mask ([B, H, S, S])
    out_p = jax.block_until_ready(self_attention(q, k, v, mask_perhead))
    ref_p = _reference(q, k, v, mask_perhead)
    assert jnp.allclose(out_p, ref_p, atol=1e-2, rtol=1e-2), "per-head masked mismatch"

    # bf16 path: inputs stay bf16 straight into the MXU (no f32 upcast in-kernel)
    qb, kb, vb = (x.astype(jnp.bfloat16) for x in (q, k, v))
    out_b = jax.block_until_ready(self_attention(qb, kb, vb, mask_shared))
    ref_b = _reference(
        qb.astype(jnp.float32), kb.astype(jnp.float32), vb.astype(jnp.float32),
        mask_shared)
    assert jnp.allclose(
        out_b.astype(jnp.float32), ref_b, atol=5e-2, rtol=5e-2
    ), "bf16 masked mismatch"

    print("KERNEL_OK")
</pallas_src>

<mosaic_0001>
module attributes {stable_mosaic.version = 11 : i64} {
  func.func @_flash_kernel(%arg0: i32, %arg1: i32, %arg2: i32, %arg3: memref<1x2x128x32xf32, #tpu.memory_space<vmem>>, %arg4: memref<1x2x128x32xf32, #tpu.memory_space<vmem>>, %arg5: memref<1x2x128x32xf32, #tpu.memory_space<vmem>>, %arg6: memref<1x2x128x32xf32, #tpu.memory_space<vmem>>, %arg7: memref<2x128x1xf32, #tpu.memory_space<vmem>>, %arg8: memref<2x128x1xf32, #tpu.memory_space<vmem>>, %arg9: memref<2x128x32xf32, #tpu.memory_space<vmem>>) attributes {dimension_semantics = [#tpu.dimension_semantics<parallel>, #tpu.dimension_semantics<parallel>, #tpu.dimension_semantics<arbitrary>], iteration_bounds = array<i64: 2, 1, 1>, scalar_prefetch = 0 : i64, scratch_operands = 3 : i64, tpu.core_type = #tpu.core_type<tc>, window_params = [{transform_indices = @transform_0, window_bounds = array<i64: 1, 2, 128, 32>}, {transform_indices = @transform_1, window_bounds = array<i64: 1, 2, 128, 32>}, {transform_indices = @transform_2, window_bounds = array<i64: 1, 2, 128, 32>}, {transform_indices = @transform_3, window_bounds = array<i64: 1, 2, 128, 32>}]} {
    %c0_i32 = arith.constant 0 : i32
    %0 = arith.cmpi eq, %arg2, %c0_i32 : i32
    %1 = arith.extui %0 : i1 to i32
    %c0_i32_0 = arith.constant 0 : i32
    %2 = arith.cmpi ne, %1, %c0_i32_0 : i32
    scf.if %2 {
      %cst_37 = arith.constant 0xFF800000 : f32
      %47 = vector.broadcast %cst_37 : f32 to vector<2x128x1xf32>
      %c0_38 = arith.constant 0 : index
      %c0_39 = arith.constant 0 : index
      %c0_40 = arith.constant 0 : index
      %48 = vector.load %arg7[%c0_38, %c0_39, %c0_40] : memref<2x128x1xf32, #tpu.memory_space<vmem>>, vector<2x128x1xf32>
      tpu.vector_store %arg7[%c0_38, %c0_39, %c0_40], %47 {strides = array<i32>} : memref<2x128x1xf32, #tpu.memory_space<vmem>>, vector<2x128x1xf32>,
      %cst_41 = arith.constant 0.000000e+00 : f32
      %49 = vector.broadcast %cst_41 : f32 to vector<2x128x1xf32>
      %c0_42 = arith.constant 0 : index
      %c0_43 = arith.constant 0 : index
      %c0_44 = arith.constant 0 : index
      %50 = vector.load %arg8[%c0_42, %c0_43, %c0_44] : memref<2x128x1xf32, #tpu.memory_space<vmem>>, vector<2x128x1xf32>
      tpu.vector_store %arg8[%c0_42, %c0_43, %c0_44], %49 {strides = array<i32>} : memref<2x128x1xf32, #tpu.memory_space<vmem>>, vector<2x128x1xf32>,
      %cst_45 = arith.constant 0.000000e+00 : f32
      %51 = vector.broadcast %cst_45 : f32 to vector<2x128x32xf32>
      %c0_46 = arith.constant 0 : index
      %c0_47 = arith.constant 0 : index
      %c0_48 = arith.constant 0 : index
      %52 = vector.load %arg9[%c0_46, %c0_47, %c0_48] : memref<2x128x32xf32, #tpu.memory_space<vmem>>, vector<2x128x32xf32>
      tpu.vector_store %arg9[%c0_46, %c0_47, %c0_48], %51 {strides = array<i32>} : memref<2x128x32xf32, #tpu.memory_space<vmem>>, vector<2x128x32xf32>,
    } else {
    }
    %c0 = arith.constant 0 : index
    %c0_1 = arith.constant 0 : index
    %c0_2 = arith.constant 0 : index
    %c0_3 = arith.constant 0 : index
    %3 = vector.load %arg3[%c0, %c0_1, %c0_2, %c0_3] : memref<1x2x128x32xf32, #tpu.memory_space<vmem>>, vector<1x2x128x32xf32>
    %4 = vector.shape_cast %3 : vector<1x2x128x32xf32> to vector<2x128x32xf32>
    %cst = arith.constant 0.176776692 : f32
    %5 = vector.broadcast %cst : f32 to vector<2x128x32xf32>
    %6 = arith.mulf %4, %5 : vector<2x128x32xf32>
    %c0_4 = arith.constant 0 : index
    %c0_5 = arith.constant 0 : index
    %c0_6 = arith.constant 0 : index
    %c0_7 = arith.constant 0 : index
    %7 = vector.load %arg4[%c0_4, %c0_5, %c0_6, %c0_7] : memref<1x2x128x32xf32, #tpu.memory_space<vmem>>, vector<1x2x128x32xf32>
    %8 = vector.shape_cast %7 : vector<1x2x128x32xf32> to vector<2x128x32xf32>
    %cst_8 = arith.constant dense<0.000000e+00> : vector<2x128x128xf32>
    %9 = tpu.matmul %6, %8, %cst_8 {dimension_numbers = #tpu.dot_dimension_numbers<[2], [2], [1], [1], [0, 0, 0, 1, 1, 1], [0], [0]>} : vector<2x128x32xf32>, vector<2x128x32xf32>, vector<2x128x128xf32> -> vector<2x128x128xf32>
    %c128_i32 = arith.constant 128 : i32
    %10 = arith.muli %arg2, %c128_i32 : i32
    %11 = tpu.iota {dimensions = array<i32: 2>} : vector<1x1x128xi32>
    %12 = vector.broadcast %10 : i32 to vector<1x1x128xi32>
    %13 = arith.addi %12, %11 : vector<1x1x128xi32>
    %c8_i32 = arith.constant 8 : i32
    %14 = vector.broadcast %c8_i32 : i32 to vector<1x1x128xi32>
    %15 = arith.cmpi slt, %13, %14 : vector<1x1x128xi32>
    %cst_9 = arith.constant -1.000000e+09 : f32
    %16 = vector.shape_cast %15 : vector<1x1x128xi1> to vector<1x1x128xi1>
    %17 = vector.broadcast %16 : vector<1x1x128xi1> to vector<2x128x128xi1>
    %18 = vector.broadcast %cst_9 : f32 to vector<2x128x128xf32>
    %19 = arith.select %17, %9, %18 : vector<2x128x128xi1>, vector<2x128x128xf32>
    %c0_10 = arith.constant 0 : index
    %c0_11 = arith.constant 0 : index
    %c0_12 = arith.constant 0 : index
    %20 = vector.load %arg7[%c0_10, %c0_11, %c0_12] : memref<2x128x1xf32, #tpu.memory_space<vmem>>, vector<2x128x1xf32>
    %cst_13 = arith.constant dense<0xFF800000> : vector<2x128xf32>
    %21 = vector.multi_reduction <maximumf>, %19, %cst_13 [2] : vector<2x128x128xf32> to vector<2x128xf32>
    %22 = vector.shape_cast %21 : vector<2x128xf32> to vector<2x128x1xf32>
    %23 = arith.maximumf %20, %22 : vector<2x128x1xf32>
    %24 = arith.subf %20, %23 : vector<2x128x1xf32>
    %25 = math.exp %24 : vector<2x128x1xf32>
    %26 = vector.broadcast %23 : vector<2x128x1xf32> to vector<2x128x128xf32>
    %27 = arith.subf %19, %26 : vector<2x128x128xf32>
    %28 = math.exp %27 : vector<2x128x128xf32>
    %c0_14 = arith.constant 0 : index
    %c0_15 = arith.constant 0 : index
    %c0_16 = arith.constant 0 : index
    %29 = vector.load %arg8[%c0_14, %c0_15, %c0_16] : memref<2x128x1xf32, #tpu.memory_space<vmem>>, vector<2x128x1xf32>
    %30 = arith.mulf %25, %29 : vector<2x128x1xf32>
    %cst_17 = arith.constant dense<0.000000e+00> : vector<2x128xf32>
    %31 = vector.multi_reduction <add>, %28, %cst_17 [2] : vector<2x128x128xf32> to vector<2x128xf32>
    %32 = vector.shape_cast %31 : vector<2x128xf32> to vector<2x128x1xf32>
    %33 = arith.addf %30, %32 : vector<2x128x1xf32>
    %c0_18 = arith.constant 0 : index
    %c0_19 = arith.constant 0 : index
    %c0_20 = arith.constant 0 : index
    %34 = vector.load %arg8[%c0_18, %c0_19, %c0_20] : memref<2x128x1xf32, #tpu.memory_space<vmem>>, vector<2x128x1xf32>
    tpu.vector_store %arg8[%c0_18, %c0_19, %c0_20], %33 {strides = array<i32>} : memref<2x128x1xf32, #tpu.memory_space<vmem>>, vector<2x128x1xf32>,
    %c0_21 = arith.constant 0 : index
    %c0_22 = arith.constant 0 : index
    %c0_23 = arith.constant 0 : index
    %c0_24 = arith.constant 0 : index
    %35 = vector.load %arg5[%c0_21, %c0_22, %c0_23, %c0_24] : memref<1x2x128x32xf32, #tpu.memory_space<vmem>>, vector<1x2x128x32xf32>
    %36 = vector.shape_cast %35 : vector<1x2x128x32xf32> to vector<2x128x32xf32>
    %cst_25 = arith.constant dense<0.000000e+00> : vector<2x128x32xf32>
    %37 = tpu.matmul %28, %36, %cst_25 {dimension_numbers = #tpu.dot_dimension_numbers<[2], [1], [1], [2], [0, 0, 0, 1, 1, 2], [0], [0]>} : vector<2x128x128xf32>, vector<2x128x32xf32>, vector<2x128x32xf32> -> vector<2x128x32xf32>
    %c0_26 = arith.constant 0 : index
    %c0_27 = arith.constant 0 : index
    %c0_28 = arith.constant 0 : index
    %38 = vector.load %arg9[%c0_26, %c0_27, %c0_28] : memref<2x128x32xf32, #tpu.memory_space<vmem>>, vector<2x128x32xf32>
    %39 = vector.broadcast %25 : vector<2x128x1xf32> to vector<2x128x32xf32>
    %40 = arith.mulf %39, %38 : vector<2x128x32xf32>
    %41 = arith.addf %40, %37 : vector<2x128x32xf32>
    %c0_29 = arith.constant 0 : index
    %c0_30 = arith.constant 0 : index
    %c0_31 = arith.constant 0 : index
    %42 = vector.load %arg9[%c0_29, %c0_30, %c0_31] : memref<2x128x32xf32, #tpu.memory_space<vmem>>, vector<2x128x32xf32>
    tpu.vector_store %arg9[%c0_29, %c0_30, %c0_31], %41 {strides = array<i32>} : memref<2x128x32xf32, #tpu.memory_space<vmem>>, vector<2x128x32xf32>,
    %c0_32 = arith.constant 0 : index
    %c0_33 = arith.constant 0 : index
    %c0_34 = arith.constant 0 : index
    %43 = vector.load %arg7[%c0_32, %c0_33, %c0_34] : memref<2x128x1xf32, #tpu.memory_space<vmem>>, vector<2x128x1xf32>
    tpu.vector_store %arg7[%c0_32, %c0_33, %c0_34], %23 {strides = array<i32>} : memref<2x128x1xf32, #tpu.memory_space<vmem>>, vector<2x128x1xf32>,
    %c0_i32_35 = arith.constant 0 : i32
    %44 = arith.cmpi eq, %arg2, %c0_i32_35 : i32
    %45 = arith.extui %44 : i1 to i32
    %c0_i32_36 = arith.constant 0 : i32
    %46 = arith.cmpi ne, %45, %c0_i32_36 : i32
    scf.if %46 {
      %c0_37 = arith.constant 0 : index
      %c0_38 = arith.constant 0 : index
      %c0_39 = arith.constant 0 : index
      %47 = vector.load %arg8[%c0_37, %c0_38, %c0_39] : memref<2x128x1xf32, #tpu.memory_space<vmem>>, vector<2x128x1xf32>
      %48 = tpu.reciprocal %47 : vector<2x128x1xf32> -> vector<2x128x1xf32>
      %c0_40 = arith.constant 0 : index
      %c0_41 = arith.constant 0 : index
      %c0_42 = arith.constant 0 : index
      %49 = vector.load %arg9[%c0_40, %c0_41, %c0_42] : memref<2x128x32xf32, #tpu.memory_space<vmem>>, vector<2x128x32xf32>
      %50 = vector.broadcast %48 : vector<2x128x1xf32> to vector<2x128x32xf32>
      %51 = arith.mulf %49, %50 : vector<2x128x32xf32>
      %c0_43 = arith.constant 0 : index
      %c0_44 = arith.constant 0 : index
      %c0_45 = arith.constant 0 : index
      %c0_46 = arith.constant 0 : index
      %52 = vector.load %arg6[%c0_43, %c0_44, %c0_45, %c0_46] : memref<1x2x128x32xf32, #tpu.memory_space<vmem>>, vector<1x2x128x32xf32>
      %53 = vector.shape_cast %52 : vector<1x2x128x32xf32> to vector<2x128x32xf32>
      %54 = vector.shape_cast %51 : vector<2x128x32xf32> to vector<1x2x128x32xf32>
      tpu.vector_store %arg6[%c0_43, %c0_44, %c0_45, %c0_46], %54 {strides = array<i32>} : memref<1x2x128x32xf32, #tpu.memory_space<vmem>>, vector<1x2x128x32xf32>,
    } else {
    }
    return
  }
  func.func @transform_0(%arg0: i32, %arg1: i32, %arg2: i32) -> (i32, i32, i32, i32) {
    %c0_i32 = arith.constant 0 : i32
    %c0_i32_0 = arith.constant 0 : i32
    %c0_i32_1 = arith.constant 0 : i32
    return %arg0, %c0_i32, %arg1, %c0_i32_0 : i32, i32, i32, i32
  }
  func.func @transform_1(%arg0: i32, %arg1: i32, %arg2: i32) -> (i32, i32, i32, i32) {
    %c0_i32 = arith.constant 0 : i32
    %c0_i32_0 = arith.constant 0 : i32
    %c0_i32_1 = arith.constant 0 : i32
    return %arg0, %c0_i32, %arg2, %c0_i32_0 : i32, i32, i32, i32
  }
  func.func @transform_2(%arg0: i32, %arg1: i32, %arg2: i32) -> (i32, i32, i32, i32) {
    %c0_i32 = arith.constant 0 : i32
    %c0_i32_0 = arith.constant 0 : i32
    %c0_i32_1 = arith.constant 0 : i32
    return %arg0, %c0_i32, %arg2, %c0_i32_0 : i32, i32, i32, i32
  }
  func.func @transform_3(%arg0: i32, %arg1: i32, %arg2: i32) -> (i32, i32, i32, i32) {
    %c0_i32 = arith.constant 0 : i32
    %c0_i32_0 = arith.constant 0 : i32
    %c0_i32_1 = arith.constant 0 : i32
    return %arg0, %c0_i32, %arg1, %c0_i32_0 : i32, i32, i32, i32
  }
}

</mosaic_0001>

<llo_original>
// kernel: _self_attention_impl.1
$region0: #{_self_attention_impl.1}
  #allocation0 [shape = 'u32[]', space=smem, size = 0x4, offset = 0x4, fixed_abs, tag = 'smem constant byte address 0x4 - core index']
  #allocation1 [shape = 'u32[144,128]{1,0:T(1,128)}', space=vmem, size = 0x12000, scoped, tag = 'internal scratch']
  #allocation2 [shape = 'f32[2,128,1]{2,1,0:T(8,128)}', space=vmem, size = 0x20000, scoped, tag = 'scratch operand']
  #allocation3 [shape = 'f32[2,128,1]{2,1,0:T(8,128)}', space=vmem, size = 0x20000, scoped, tag = 'scratch operand']
  #allocation4 [shape = 'f32[2,128,32]{2,1,0:T(8,128)}', space=vmem, size = 0x20000, scoped, tag = 'scratch operand']
  %s0 = inlined_call_operand.vmem [shape: f32[2,2,128,32], index: 0, kind: input, shape index: {}]
  %s1 = inlined_call_operand.vmem [shape: f32[2,2,128,32], index: 1, kind: input, shape index: {}]
  %s2 = inlined_call_operand.vmem [shape: f32[2,2,128,32], index: 2, kind: input, shape index: {}]
  %s3 = inlined_call_operand.vmem [shape: f32[2,2,128,32], index: 3, kind: output, shape index: {}]
  %s4 = sld [smem:[#allocation0]]
  $region53: #{_self_attention_impl.1} parent=0
    _
  %s6 = ssub.s32 1, %s4
  %s7 = scalar_select 0, %s6, %s4
  loop: start=0, step=1, limit=4
  $region2: #{_self_attention_impl.1} parent=0 // loop_pre_header
    _
  $region3: #{_self_attention_impl.1} parent=0 // loop_header
    %s9 = sphi 0, %s13
    %p10 = scmp.ge.s32.totalorder %s9, 4
    %s16 = sphi 0, %s35
    %s17 = sphi 0, %s31
    %s18 = sphi 0, %s27
    %s19 = sphi 0, %s16
    %s20 = sphi 0, %s17
    %s21 = sphi 0, %s18
    %s22 = sphi 0, %s19
    %s23 = sphi 0, %s20
    %s24 = sphi 0, %s21
    %s40 = sphi 0, %s42
    %s43 = sphi 0, %s40
    %s44 = sphi 0, %s43
    %s60 = sphi 0, %s44
    %s68 = sphi 0, %s70
    %s71 = sphi 0, %s68
    %s72 = sphi 0, %s71
    %s88 = sphi 0, %s72
    %s96 = sphi 0, %s98
    %s99 = sphi 0, %s96
    %s100 = sphi 0, %s99
    %s116 = sphi 0, %s100
    %s124 = sphi 0, %s126
    %s127 = sphi 0, %s124
    %s128 = sphi 0, %s127
    %s144 = sphi 0, %s128
  $region4: #{_self_attention_impl.1} parent=0 // loop_header_branch
    %12 = sbr.rel (%p10) target = $region8
  $region5: #{_self_attention_impl.1} parent=0 // loop_body
    %s14 = ssub.s32 %s9, 1
    %s15 = ssub.s32 %s9, 2
    %s25 = sadd.s32 1, %s18
    %p26 = scmp.ge.s32.totalorder %s25, 1
    %s27 = scalar_select %p26, 0, %s25
    %s28 = sadd.s32 1, %s17
    %s29 = scalar_select %p26, %s28, %s17
    %p30 = scmp.ge.s32.totalorder %s29, 1
    %s31 = scalar_select %p30, 0, %s29
    %s32 = sadd.s32 1, %s16
    %s33 = scalar_select %p30, %s32, %s16
    %p34 = scmp.ge.s32.totalorder %s33, 2
    %s35 = scalar_select %p34, 0, %s33
    %s36 = ssub.s32 %s16, %s35
    %s37 = ssub.s32 %s17, %s31
    %s38 = sor.u32 %s36, %s37
    %p39 = scmp.eq.s32.totalorder %s38, 0
    %s41 = sadd.s32 %s40, 1
    %s42 = scalar_select %p39, %s40, %s41
    %p45 = pneg %p39
    %p46 = scmp.eq.s32.totalorder %s9, 1
    %p47 = por %p45, %p46
    %p48 = scmp.ne.s32.totalorder %s40, %s43
    %p49 = scmp.eq.s32.totalorder %s9, 0
    %p50 = por %p48, %p49
    %p51 = scmp.ne.s32.totalorder %s40, %s43
    %p52 = scmp.eq.s32.totalorder %s14, 1
    %p53 = por %p51, %p52
    %p54 = scmp.ne.s32.totalorder %s43, %s44
    %p55 = scmp.eq.s32.totalorder %s14, 0
    %p56 = por %p54, %p55
    %p57 = scmp.ne.s32.totalorder %s43, %s44
    %p58 = scmp.eq.s32.totalorder %s15, 1
    %p59 = por %p57, %p58
    %p61 = scmp.ne.s32.totalorder %s44, %s60
    %p62 = scmp.eq.s32.totalorder %s15, 0
    %p63 = por %p61, %p62
    %s64 = ssub.s32 %s16, %s35
    %s65 = ssub.s32 %s18, %s27
    %s66 = sor.u32 %s64, %s65
    %p67 = scmp.eq.s32.totalorder %s66, 0
    %s69 = sadd.s32 %s68, 1
    %s70 = scalar_select %p67, %s68, %s69
    %p73 = pneg %p67
    %p74 = scmp.eq.s32.totalorder %s9, 1
    %p75 = por %p73, %p74
    %p76 = scmp.ne.s32.totalorder %s68, %s71
    %p77 = scmp.eq.s32.totalorder %s9, 0
    %p78 = por %p76, %p77
    %p79 = scmp.ne.s32.totalorder %s68, %s71
    %p80 = scmp.eq.s32.totalorder %s14, 1
    %p81 = por %p79, %p80
    %p82 = scmp.ne.s32.totalorder %s71, %s72
    %p83 = scmp.eq.s32.totalorder %s14, 0
    %p84 = por %p82, %p83
    %p85 = scmp.ne.s32.totalorder %s71, %s72
    %p86 = scmp.eq.s32.totalorder %s15, 1
    %p87 = por %p85, %p86
    %p89 = scmp.ne.s32.totalorder %s72, %s88
    %p90 = scmp.eq.s32.totalorder %s15, 0
    %p91 = por %p89, %p90
    %s92 = ssub.s32 %s16, %s35
    %s93 = ssub.s32 %s18, %s27
    %s94 = sor.u32 %s92, %s93
    %p95 = scmp.eq.s32.totalorder %s94, 0
    %s97 = sadd.s32 %s96, 1
    %s98 = scalar_select %p95, %s96, %s97
    %p101 = pneg %p95
    %p102 = scmp.eq.s32.totalorder %s9, 1
    %p103 = por %p101, %p102
    %p104 = scmp.ne.s32.totalorder %s96, %s99
    %p105 = scmp.eq.s32.totalorder %s9, 0
    %p106 = por %p104, %p105
    %p107 = scmp.ne.s32.totalorder %s96, %s99
    %p108 = scmp.eq.s32.totalorder %s14, 1
    %p109 = por %p107, %p108
    %p110 = scmp.ne.s32.totalorder %s99, %s100
    %p111 = scmp.eq.s32.totalorder %s14, 0
    %p112 = por %p110, %p111
    %p113 = scmp.ne.s32.totalorder %s99, %s100
    %p114 = scmp.eq.s32.totalorder %s15, 1
    %p115 = por %p113, %p114
    %p117 = scmp.ne.s32.totalorder %s100, %s116
    %p118 = scmp.eq.s32.totalorder %s15, 0
    %p119 = por %p117, %p118
    %s120 = ssub.s32 %s16, %s35
    %s121 = ssub.s32 %s17, %s31
    %s122 = sor.u32 %s120, %s121
    %p123 = scmp.eq.s32.totalorder %s122, 0
    %s125 = sadd.s32 %s124, 1
    %s126 = scalar_select %p123, %s124, %s125
    %p129 = pneg %p123
    %p130 = scmp.eq.s32.totalorder %s9, 1
    %p131 = por %p129, %p130
    %p132 = scmp.ne.s32.totalorder %s124, %s127
    %p133 = scmp.eq.s32.totalorder %s9, 0
    %p134 = por %p132, %p133
    %p135 = scmp.ne.s32.totalorder %s124, %s127
    %p136 = scmp.eq.s32.totalorder %s14, 1
    %p137 = por %p135, %p136
    %p138 = scmp.ne.s32.totalorder %s127, %s128
    %p139 = scmp.eq.s32.totalorder %s14, 0
    %p140 = por %p138, %p139
    %p141 = scmp.ne.s32.totalorder %s127, %s128
    %p142 = scmp.eq.s32.totalorder %s15, 1
    %p143 = por %p141, %p142
    %p145 = scmp.ne.s32.totalorder %s128, %s144
    %p146 = scmp.eq.s32.totalorder %s15, 0
    %p147 = por %p145, %p146
    %p148 = scmp.le.s32.totalorder 1, %s9
    %p149 = scmp.lt.s32.totalorder %s9, 3
    %p150 = pnand %p148, %p149
    %p151 = pneg %p150
    // Predicated region
    $region9: #{_self_attention_impl.1} parent=5 // pred_check
      _
    $region10: #{_self_attention_impl.1} parent=5 // pred_check_branch
      %153 = sbr.rel (%p150) target = $region12
    $region11: #{_self_attention_impl.1} parent=5 // pred_region
      %s154 = ssub.s32 %s9, 1
    $region12: #{_self_attention_impl.1} parent=5 // pred_fallthru
      _
    %p155 = scmp.lt.s32.totalorder %s9, 2
    // Predicated region
    $region13: #{_self_attention_impl.1} parent=5 // pred_check
      %p156 = pneg %p155
    $region14: #{_self_attention_impl.1} parent=5 // pred_check_branch
      %158 = sbr.rel (%p156) target = $region16
    $region15: #{_self_attention_impl.1} parent=5 // pred_region
      // Predicated region
      $region17: #{_self_attention_impl.1} parent=15 // pred_check
        %p159 = pneg %p50
      $region18: #{_self_attention_impl.1} parent=15 // pred_check_branch
        %161 = sbr.rel (%p159) target = $region20
      $region19: #{_self_attention_impl.1} parent=15 // pred_region
        %s162 = smul.u32 16, %s17
        %p163 = scmp.lt.s32.totalorder %s16, 1
        %s164 = scalar_select %p163, %s16, 1
        %p165 = scmp.lt.s32.totalorder %s162, 15
        %s166 = scalar_select %p165, %s162, 15
        %s167 = smul.addr %s164, 32
        %s168 = sadd.s32 %s166, %s167
        %s169 = smul.addr %s168, 8
        %s170 = scalar_lea.vmem %s0, %s169
        %s171 = smul.u32 16, %s17
      $region20: #{_self_attention_impl.1} parent=15 // pred_fallthru
        _
      // Predicated region
      $region21: #{_self_attention_impl.1} parent=15 // pred_check
        %p172 = pneg %p78
      $region22: #{_self_attention_impl.1} parent=15 // pred_check_branch
        %174 = sbr.rel (%p172) target = $region24
      $region23: #{_self_attention_impl.1} parent=15 // pred_region
        %s175 = smul.u32 16, %s18
        %p176 = scmp.lt.s32.totalorder %s16, 1
        %s177 = scalar_select %p176, %s16, 1
        %p178 = scmp.lt.s32.totalorder %s175, 15
        %s179 = scalar_select %p178, %s175, 15
        %s180 = smul.addr %s177, 32
        %s181 = sadd.s32 %s179, %s180
        %s182 = smul.addr %s181, 8
        %s183 = scalar_lea.vmem %s1, %s182
        %s184 = smul.u32 16, %s18
      $region24: #{_self_attention_impl.1} parent=15 // pred_fallthru
        _
      // Predicated region
      $region25: #{_self_attention_impl.1} parent=15 // pred_check
        %p185 = pneg %p106
      $region26: #{_self_attention_impl.1} parent=15 // pred_check_branch
        %187 = sbr.rel (%p185) target = $region28
      $region27: #{_self_attention_impl.1} parent=15 // pred_region
        %s188 = smul.u32 16, %s18
        %p189 = scmp.lt.s32.totalorder %s16, 1
        %s190 = scalar_select %p189, %s16, 1
        %p191 = scmp.lt.s32.totalorder %s188, 15
        %s192 = scalar_select %p191, %s188, 15
        %s193 = smul.addr %s190, 32
        %s194 = sadd.s32 %s192, %s193
        %s195 = smul.addr %s194, 8
        %s196 = scalar_lea.vmem %s2, %s195
        %s197 = smul.u32 16, %s18
      $region28: #{_self_attention_impl.1} parent=15 // pred_fallthru
        _
    $region16: #{_self_attention_impl.1} parent=5 // pred_fallthru
      _
    %p198 = scmp.le.s32.totalorder 1, %s9
    %p199 = scmp.lt.s32.totalorder %s9, 3
    %p200 = pnand %p198, %p199
    %p201 = pneg %p200
    // Predicated region
    $region29: #{_self_attention_impl.1} parent=5 // pred_check
      _
    $region30: #{_self_attention_impl.1} parent=5 // pred_check_branch
      %203 = sbr.rel (%p200) target = $region32
    $region31: #{_self_attention_impl.1} parent=5 // pred_region
      %s204 = ssub.s32 %s9, 1
      %s205 = smul.u32 16, %s20
      %p206 = scmp.lt.s32.totalorder %s19, 1
      %s207 = scalar_select %p206, %s19, 1
      %p208 = scmp.lt.s32.totalorder %s205, 15
      %s209 = scalar_select %p208, %s205, 15
      %s210 = smul.addr %s207, 32
      %s211 = sadd.s32 %s209, %s210
      %s212 = smul.addr %s211, 8
      %s213 = scalar_lea.vmem %s0, %s212
      %p214 = pneg %p56
      %p215 = pneg %p53
      %s216 = smul.u32 16, %s21
      %p217 = scmp.lt.s32.totalorder %s19, 1
      %s218 = scalar_select %p217, %s19, 1
      %p219 = scmp.lt.s32.totalorder %s216, 15
      %s220 = scalar_select %p219, %s216, 15
      %s221 = smul.addr %s218, 32
      %s222 = sadd.s32 %s220, %s221
      %s223 = smul.addr %s222, 8
      %s224 = scalar_lea.vmem %s1, %s223
      %p225 = pneg %p84
      %p226 = pneg %p81
      %s227 = smul.u32 16, %s21
      %p228 = scmp.lt.s32.totalorder %s19, 1
      %s229 = scalar_select %p228, %s19, 1
      %p230 = scmp.lt.s32.totalorder %s227, 15
      %s231 = scalar_select %p230, %s227, 15
      %s232 = smul.addr %s229, 32
      %s233 = sadd.s32 %s231, %s232
      %s234 = smul.addr %s233, 8
      %s235 = scalar_lea.vmem %s2, %s234
      %p236 = pneg %p112
      %p237 = pneg %p109
      %p238 = pneg %p140
      %p239 = pneg %p137
      %s240 = smul.u32 16, %s20
      %p241 = scmp.lt.s32.totalorder %s19, 1
      %s242 = scalar_select %p241, %s19, 1
      %p243 = scmp.lt.s32.totalorder %s240, 15
      %s244 = scalar_select %p243, %s240, 15
      %s245 = smul.addr %s242, 32
      %s246 = sadd.s32 %s244, %s245
      %s247 = smul.addr %s246, 8
      %s248 = scalar_lea.vmem %s3, %s247
      %s249 = smul.u32 16, %s20
      %p250 = scmp.lt.s32.totalorder %s19, 1
      %s251 = scalar_select %p250, %s19, 1
      %p252 = scmp.lt.s32.totalorder %s249, 15
      %s253 = scalar_select %p252, %s249, 15
      %s254 = smul.addr %s251, 32
      %s255 = sadd.s32 %s253, %s254
      %s256 = smul.addr %s255, 8
      %s257 = scalar_lea.vmem %s0, %s256
      %s258 = smul.u32 16, %s20
      %s259 = smul.u32 16, %s21
      %p260 = scmp.lt.s32.totalorder %s19, 1
      %s261 = scalar_select %p260, %s19, 1
      %p262 = scmp.lt.s32.totalorder %s259, 15
      %s263 = scalar_select %p262, %s259, 15
      %s264 = smul.addr %s261, 32
      %s265 = sadd.s32 %s263, %s264
      %s266 = smul.addr %s265, 8
      %s267 = scalar_lea.vmem %s1, %s266
      %s268 = smul.u32 16, %s21
      %s269 = smul.u32 16, %s21
      %p270 = scmp.lt.s32.totalorder %s19, 1
      %s271 = scalar_select %p270, %s19, 1
      %p272 = scmp.lt.s32.totalorder %s269, 15
      %s273 = scalar_select %p272, %s269, 15
      %s274 = smul.addr %s271, 32
      %s275 = sadd.s32 %s273, %s274
      %s276 = smul.addr %s275, 8
      %s277 = scalar_lea.vmem %s2, %s276
      %s278 = smul.u32 16, %s21
      %s279 = smul.u32 16, %s20
      %p280 = scmp.lt.s32.totalorder %s19, 1
      %s281 = scalar_select %p280, %s19, 1
      %p282 = scmp.lt.s32.totalorder %s279, 15
      %s283 = scalar_select %p282, %s279, 15
      %s284 = smul.addr %s281, 32
      %s285 = sadd.s32 %s283, %s284
      %s286 = smul.addr %s285, 8
      %s287 = scalar_lea.vmem %s3, %s286
      %s288 = smul.u32 16, %s20
      %p289 = scmp.eq.s32.totalorder %s21, 0
      // Predicated region
      $region33: #{_self_attention_impl.1} parent=31 // pred_check
        %p290 = pneg %p289
      $region34: #{_self_attention_impl.1} parent=31 // pred_check_branch
        %292 = sbr.rel (%p290) target = $region36
      $region35: #{_self_attention_impl.1} parent=31 // pred_region
        %vm293 = vcmask 7168
        %294 = vst.msk [vmem:[#allocation2] sm:$0xff] %vm293, -inf
        %295 = vst.msk [vmem:[#allocation2 + $0x8] sm:$0xff] %vm293, -inf
        %296 = vst.msk [vmem:[#allocation2 + $0x10] sm:$0xff] %vm293, -inf
        %297 = vst.msk [vmem:[#allocation2 + $0x18] sm:$0xff] %vm293, -inf
        %298 = vst.msk [vmem:[#allocation2 + $0x20] sm:$0xff] %vm293, -inf
        %299 = vst.msk [vmem:[#allocation2 + $0x28] sm:$0xff] %vm293, -inf
        %300 = vst.msk [vmem:[#allocation2 + $0x30] sm:$0xff] %vm293, -inf
        %301 = vst.msk [vmem:[#allocation2 + $0x38] sm:$0xff] %vm293, -inf
        %302 = vst.msk [vmem:[#allocation2 + $0x40] sm:$0xff] %vm293, -inf
        %303 = vst.msk [vmem:[#allocation2 + $0x48] sm:$0xff] %vm293, -inf
        %304 = vst.msk [vmem:[#allocation2 + $0x50] sm:$0xff] %vm293, -inf
        %305 = vst.msk [vmem:[#allocation2 + $0x58] sm:$0xff] %vm293, -inf
        %306 = vst.msk [vmem:[#allocation2 + $0x60] sm:$0xff] %vm293, -inf
        %307 = vst.msk [vmem:[#allocation2 + $0x68] sm:$0xff] %vm293, -inf
        %308 = vst.msk [vmem:[#allocation2 + $0x70] sm:$0xff] %vm293, -inf
        %309 = vst.msk [vmem:[#allocation2 + $0x78] sm:$0xff] %vm293, -inf
        %310 = vst.msk [vmem:[#allocation2 + $0x80] sm:$0xff] %vm293, -inf
        %311 = vst.msk [vmem:[#allocation2 + $0x88] sm:$0xff] %vm293, -inf
        %312 = vst.msk [vmem:[#allocation2 + $0x90] sm:$0xff] %vm293, -inf
        %313 = vst.msk [vmem:[#allocation2 + $0x98] sm:$0xff] %vm293, -inf
        %314 = vst.msk [vmem:[#allocation2 + $0xa0] sm:$0xff] %vm293, -inf
        %315 = vst.msk [vmem:[#allocation2 + $0xa8] sm:$0xff] %vm293, -inf
        %316 = vst.msk [vmem:[#allocation2 + $0xb0] sm:$0xff] %vm293, -inf
        %317 = vst.msk [vmem:[#allocation2 + $0xb8] sm:$0xff] %vm293, -inf
        %318 = vst.msk [vmem:[#allocation2 + $0xc0] sm:$0xff] %vm293, -inf
        %319 = vst.msk [vmem:[#allocation2 + $0xc8] sm:$0xff] %vm293, -inf
        %320 = vst.msk [vmem:[#allocation2 + $0xd0] sm:$0xff] %vm293, -inf
        %321 = vst.msk [vmem:[#allocation2 + $0xd8] sm:$0xff] %vm293, -inf
        %322 = vst.msk [vmem:[#allocation2 + $0xe0] sm:$0xff] %vm293, -inf
        %323 = vst.msk [vmem:[#allocation2 + $0xe8] sm:$0xff] %vm293, -inf
        %324 = vst.msk [vmem:[#allocation2 + $0xf0] sm:$0xff] %vm293, -inf
        %325 = vst.msk [vmem:[#allocation2 + $0xf8] sm:$0xff] %vm293, -inf
        %326 = vst.msk [vmem:[#allocation3] sm:$0xff] %vm293, 0.0
        %327 = vst.msk [vmem:[#allocation3 + $0x8] sm:$0xff] %vm293, 0.0
        %328 = vst.msk [vmem:[#allocation3 + $0x10] sm:$0xff] %vm293, 0.0
        %329 = vst.msk [vmem:[#allocation3 + $0x18] sm:$0xff] %vm293, 0.0
        %330 = vst.msk [vmem:[#allocation3 + $0x20] sm:$0xff] %vm293, 0.0
        %331 = vst.msk [vmem:[#allocation3 + $0x28] sm:$0xff] %vm293, 0.0
        %332 = vst.msk [vmem:[#allocation3 + $0x30] sm:$0xff] %vm293, 0.0
        %333 = vst.msk [vmem:[#allocation3 + $0x38] sm:$0xff] %vm293, 0.0
        %334 = vst.msk [vmem:[#allocation3 + $0x40] sm:$0xff] %vm293, 0.0
        %335 = vst.msk [vmem:[#allocation3 + $0x48] sm:$0xff] %vm293, 0.0
        %336 = vst.msk [vmem:[#allocation3 + $0x50] sm:$0xff] %vm293, 0.0
        %337 = vst.msk [vmem:[#allocation3 + $0x58] sm:$0xff] %vm293, 0.0
        %338 = vst.msk [vmem:[#allocation3 + $0x60] sm:$0xff] %vm293, 0.0
        %339 = vst.msk [vmem:[#allocation3 + $0x68] sm:$0xff] %vm293, 0.0
        %340 = vst.msk [vmem:[#allocation3 + $0x70] sm:$0xff] %vm293, 0.0
        %341 = vst.msk [vmem:[#allocation3 + $0x78] sm:$0xff] %vm293, 0.0
        %342 = vst.msk [vmem:[#allocation3 + $0x80] sm:$0xff] %vm293, 0.0
        %343 = vst.msk [vmem:[#allocation3 + $0x88] sm:$0xff] %vm293, 0.0
        %344 = vst.msk [vmem:[#allocation3 + $0x90] sm:$0xff] %vm293, 0.0
        %345 = vst.msk [vmem:[#allocation3 + $0x98] sm:$0xff] %vm293, 0.0
        %346 = vst.msk [vmem:[#allocation3 + $0xa0] sm:$0xff] %vm293, 0.0
        %347 = vst.msk [vmem:[#allocation3 + $0xa8] sm:$0xff] %vm293, 0.0
        %348 = vst.msk [vmem:[#allocation3 + $0xb0] sm:$0xff] %vm293, 0.0
        %349 = vst.msk [vmem:[#allocation3 + $0xb8] sm:$0xff] %vm293, 0.0
        %350 = vst.msk [vmem:[#allocation3 + $0xc0] sm:$0xff] %vm293, 0.0
        %351 = vst.msk [vmem:[#allocation3 + $0xc8] sm:$0xff] %vm293, 0.0
        %352 = vst.msk [vmem:[#allocation3 + $0xd0] sm:$0xff] %vm293, 0.0
        %353 = vst.msk [vmem:[#allocation3 + $0xd8] sm:$0xff] %vm293, 0.0
        %354 = vst.msk [vmem:[#allocation3 + $0xe0] sm:$0xff] %vm293, 0.0
        %355 = vst.msk [vmem:[#allocation3 + $0xe8] sm:$0xff] %vm293, 0.0
        %356 = vst.msk [vmem:[#allocation3 + $0xf0] sm:$0xff] %vm293, 0.0
        %357 = vst.msk [vmem:[#allocation3 + $0xf8] sm:$0xff] %vm293, 0.0
        %vm358 = vcmask 261120
        %359 = vst.msk [vmem:[#allocation4] sm:$0xff] %vm358, 0.0
        %360 = vst.msk [vmem:[#allocation4 + $0x8] sm:$0xff] %vm358, 0.0
        %361 = vst.msk [vmem:[#allocation4 + $0x10] sm:$0xff] %vm358, 0.0
        %362 = vst.msk [vmem:[#allocation4 + $0x18] sm:$0xff] %vm358, 0.0
        %363 = vst.msk [vmem:[#allocation4 + $0x20] sm:$0xff] %vm358, 0.0
        %364 = vst.msk [vmem:[#allocation4 + $0x28] sm:$0xff] %vm358, 0.0
        %365 = vst.msk [vmem:[#allocation4 + $0x30] sm:$0xff] %vm358, 0.0
        %366 = vst.msk [vmem:[#allocation4 + $0x38] sm:$0xff] %vm358, 0.0
        %367 = vst.msk [vmem:[#allocation4 + $0x40] sm:$0xff] %vm358, 0.0
        %368 = vst.msk [vmem:[#allocation4 + $0x48] sm:$0xff] %vm358, 0.0
        %369 = vst.msk [vmem:[#allocation4 + $0x50] sm:$0xff] %vm358, 0.0
        %370 = vst.msk [vmem:[#allocation4 + $0x58] sm:$0xff] %vm358, 0.0
        %371 = vst.msk [vmem:[#allocation4 + $0x60] sm:$0xff] %vm358, 0.0
        %372 = vst.msk [vmem:[#allocation4 + $0x68] sm:$0xff] %vm358, 0.0
        %373 = vst.msk [vmem:[#allocation4 + $0x70] sm:$0xff] %vm358, 0.0
        %374 = vst.msk [vmem:[#allocation4 + $0x78] sm:$0xff] %vm358, 0.0
        %375 = vst.msk [vmem:[#allocation4 + $0x80] sm:$0xff] %vm358, 0.0
        %376 = vst.msk [vmem:[#allocation4 + $0x88] sm:$0xff] %vm358, 0.0
        %377 = vst.msk [vmem:[#allocation4 + $0x90] sm:$0xff] %vm358, 0.0
        %378 = vst.msk [vmem:[#allocation4 + $0x98] sm:$0xff] %vm358, 0.0
        %379 = vst.msk [vmem:[#allocation4 + $0xa0] sm:$0xff] %vm358, 0.0
        %380 = vst.msk [vmem:[#allocation4 + $0xa8] sm:$0xff] %vm358, 0.0
        %381 = vst.msk [vmem:[#allocation4 + $0xb0] sm:$0xff] %vm358, 0.0
        %382 = vst.msk [vmem:[#allocation4 + $0xb8] sm:$0xff] %vm358, 0.0
        %383 = vst.msk [vmem:[#allocation4 + $0xc0] sm:$0xff] %vm358, 0.0
        %384 = vst.msk [vmem:[#allocation4 + $0xc8] sm:$0xff] %vm358, 0.0
        %385 = vst.msk [vmem:[#allocation4 + $0xd0] sm:$0xff] %vm358, 0.0
        %386 = vst.msk [vmem:[#allocation4 + $0xd8] sm:$0xff] %vm358, 0.0
        %387 = vst.msk [vmem:[#allocation4 + $0xe0] sm:$0xff] %vm358, 0.0
        %388 = vst.msk [vmem:[#allocation4 + $0xe8] sm:$0xff] %vm358, 0.0
        %389 = vst.msk [vmem:[#allocation4 + $0xf0] sm:$0xff] %vm358, 0.0
        %390 = vst.msk [vmem:[#allocation4 + $0xf8] sm:$0xff] %vm358, 0.0
      $region36: #{_self_attention_impl.1} parent=31 // pred_fallthru
        _
      %v391 = vld [vmem:[%s257] sm:$0xff]
      %v392 = vld [vmem:[%s257 + $0x8] sm:$0xff]
      %v393 = vld [vmem:[%s257 + $0x10] sm:$0xff]
      %v394 = vld [vmem:[%s257 + $0x18] sm:$0xff]
      %v395 = vld [vmem:[%s257 + $0x20] sm:$0xff]
      %v396 = vld [vmem:[%s257 + $0x28] sm:$0xff]
      %v397 = vld [vmem:[%s257 + $0x30] sm:$0xff]
      %v398 = vld [vmem:[%s257 + $0x38] sm:$0xff]
      %v399 = vld [vmem:[%s257 + $0x40] sm:$0xff]
      %v400 = vld [vmem:[%s257 + $0x48] sm:$0xff]
      %v401 = vld [vmem:[%s257 + $0x50] sm:$0xff]
      %v402 = vld [vmem:[%s257 + $0x58] sm:$0xff]
      %v403 = vld [vmem:[%s257 + $0x60] sm:$0xff]
      %v404 = vld [vmem:[%s257 + $0x68] sm:$0xff]
      %v405 = vld [vmem:[%s257 + $0x70] sm:$0xff]
      %v406 = vld [vmem:[%s257 + $0x78] sm:$0xff]
      %v407 = vld [vmem:[%s257 + $0x80] sm:$0xff]
      %v408 = vld [vmem:[%s257 + $0x88] sm:$0xff]
      %v409 = vld [vmem:[%s257 + $0x90] sm:$0xff]
      %v410 = vld [vmem:[%s257 + $0x98] sm:$0xff]
      %v411 = vld [vmem:[%s257 + $0xa0] sm:$0xff]
      %v412 = vld [vmem:[%s257 + $0xa8] sm:$0xff]
      %v413 = vld [vmem:[%s257 + $0xb0] sm:$0xff]
      %v414 = vld [vmem:[%s257 + $0xb8] sm:$0xff]
      %v415 = vld [vmem:[%s257 + $0xc0] sm:$0xff]
      %v416 = vld [vmem:[%s257 + $0xc8] sm:$0xff]
      %v417 = vld [vmem:[%s257 + $0xd0] sm:$0xff]
      %v418 = vld [vmem:[%s257 + $0xd8] sm:$0xff]
      %v419 = vld [vmem:[%s257 + $0xe0] sm:$0xff]
      %v420 = vld [vmem:[%s257 + $0xe8] sm:$0xff]
      %v421 = vld [vmem:[%s257 + $0xf0] sm:$0xff]
      %v422 = vld [vmem:[%s257 + $0xf8] sm:$0xff]
      %v423 = vmul.f32 %v391, 0.17677669
      %v424 = vmul.f32 %v392, 0.17677669
      %v425 = vmul.f32 %v393, 0.17677669
      %v426 = vmul.f32 %v394, 0.17677669
      %v427 = vmul.f32 %v395, 0.17677669
      %v428 = vmul.f32 %v396, 0.17677669
      %v429 = vmul.f32 %v397, 0.17677669
      %v430 = vmul.f32 %v398, 0.17677669
      %v431 = vmul.f32 %v399, 0.17677669
      %v432 = vmul.f32 %v400, 0.17677669
      %v433 = vmul.f32 %v401, 0.17677669
      %v434 = vmul.f32 %v402, 0.17677669
      %v435 = vmul.f32 %v403, 0.17677669
      %v436 = vmul.f32 %v404, 0.17677669
      %v437 = vmul.f32 %v405, 0.17677669
      %v438 = vmul.f32 %v406, 0.17677669
      %v439 = vmul.f32 %v407, 0.17677669
      %v440 = vmul.f32 %v408, 0.17677669
      %v441 = vmul.f32 %v409, 0.17677669
      %v442 = vmul.f32 %v410, 0.17677669
      %v443 = vmul.f32 %v411, 0.17677669
      %v444 = vmul.f32 %v412, 0.17677669
      %v445 = vmul.f32 %v413, 0.17677669
      %v446 = vmul.f32 %v414, 0.17677669
      %v447 = vmul.f32 %v415, 0.17677669
      %v448 = vmul.f32 %v416, 0.17677669
      %v449 = vmul.f32 %v417, 0.17677669
      %v450 = vmul.f32 %v418, 0.17677669
      %v451 = vmul.f32 %v419, 0.17677669
      %v452 = vmul.f32 %v420, 0.17677669
      %v453 = vmul.f32 %v421, 0.17677669
      %v454 = vmul.f32 %v422, 0.17677669
      %v455 = vld [vmem:[%s267] sm:$0xff]
      %v456 = vld [vmem:[%s267 + $0x8] sm:$0xff]
      %v457 = vld [vmem:[%s267 + $0x10] sm:$0xff]
      %v458 = vld [vmem:[%s267 + $0x18] sm:$0xff]
      %v459 = vld [vmem:[%s267 + $0x20] sm:$0xff]
      %v460 = vld [vmem:[%s267 + $0x28] sm:$0xff]
      %v461 = vld [vmem:[%s267 + $0x30] sm:$0xff]
      %v462 = vld [vmem:[%s267 + $0x38] sm:$0xff]
      %v463 = vld [vmem:[%s267 + $0x40] sm:$0xff]
      %v464 = vld [vmem:[%s267 + $0x48] sm:$0xff]
      %v465 = vld [vmem:[%s267 + $0x50] sm:$0xff]
      %v466 = vld [vmem:[%s267 + $0x58] sm:$0xff]
      %v467 = vld [vmem:[%s267 + $0x60] sm:$0xff]
      %v468 = vld [vmem:[%s267 + $0x68] sm:$0xff]
      %v469 = vld [vmem:[%s267 + $0x70] sm:$0xff]
      %v470 = vld [vmem:[%s267 + $0x78] sm:$0xff]
      %v471 = vld [vmem:[%s267 + $0x80] sm:$0xff]
      %v472 = vld [vmem:[%s267 + $0x88] sm:$0xff]
      %v473 = vld [vmem:[%s267 + $0x90] sm:$0xff]
      %v474 = vld [vmem:[%s267 + $0x98] sm:$0xff]
      %v475 = vld [vmem:[%s267 + $0xa0] sm:$0xff]
      %v476 = vld [vmem:[%s267 + $0xa8] sm:$0xff]
      %v477 = vld [vmem:[%s267 + $0xb0] sm:$0xff]
      %v478 = vld [vmem:[%s267 + $0xb8] sm:$0xff]
      %v479 = vld [vmem:[%s267 + $0xc0] sm:$0xff]
      %v480 = vld [vmem:[%s267 + $0xc8] sm:$0xff]
      %v481 = vld [vmem:[%s267 + $0xd0] sm:$0xff]
      %v482 = vld [vmem:[%s267 + $0xd8] sm:$0xff]
      %v483 = vld [vmem:[%s267 + $0xe0] sm:$0xff]
      %v484 = vld [vmem:[%s267 + $0xe8] sm:$0xff]
      %v485 = vld [vmem:[%s267 + $0xf0] sm:$0xff]
      %v486 = vld [vmem:[%s267 + $0xf8] sm:$0xff]
      %vm487 = vcmask 261120
      %v489 = vsel %vm487, %v423, 0
      %v492 = vsel %vm487, %v424, 0
      %v495 = vsel %vm487, %v425, 0
      %v498 = vsel %vm487, %v426, 0
      %v501 = vsel %vm487, %v427, 0
      %v504 = vsel %vm487, %v428, 0
      %v507 = vsel %vm487, %v429, 0
      %v510 = vsel %vm487, %v430, 0
      %v513 = vsel %vm487, %v431, 0
      %v516 = vsel %vm487, %v432, 0
      %v519 = vsel %vm487, %v433, 0
      %v522 = vsel %vm487, %v434, 0
      %v525 = vsel %vm487, %v435, 0
      %v528 = vsel %vm487, %v436, 0
      %v531 = vsel %vm487, %v437, 0
      %v534 = vsel %vm487, %v438, 0
      %v537 = vsel %vm487, %v455, 0
      %v540 = vsel %vm487, %v456, 0
      %v543 = vsel %vm487, %v457, 0
      %v546 = vsel %vm487, %v458, 0
      %v549 = vsel %vm487, %v459, 0
      %v552 = vsel %vm487, %v460, 0
      %v555 = vsel %vm487, %v461, 0
      %v558 = vsel %vm487, %v462, 0
      %v561 = vsel %vm487, %v463, 0
      %v564 = vsel %vm487, %v464, 0
      %v567 = vsel %vm487, %v465, 0
      %v570 = vsel %vm487, %v466, 0
      %v573 = vsel %vm487, %v467, 0
      %v576 = vsel %vm487, %v468, 0
      %v579 = vsel %vm487, %v469, 0
      %v582 = vsel %vm487, %v470, 0
      %584 = vmatprep.subr.mxu0 0.0
      %585 = vmatpush1.xpose.msra.mxu0 %v582
      %586 = vmatprep.subr.mxu0 0.0
      %587 = vmatpush1.xpose.msra.mxu0 %v579
      %588 = vmatprep.subr.mxu0 0.0
      %589 = vmatpush1.xpose.msra.mxu0 %v576
      %590 = vmatprep.subr.mxu0 0.0
      %591 = vmatpush1.xpose.msra.mxu0 %v573
      %592 = vmatprep.subr.mxu0 0.0
      %593 = vmatpush1.xpose.msra.mxu0 %v570
      %594 = vmatprep.subr.mxu0 0.0
      %595 = vmatpush1.xpose.msra.mxu0 %v567
      %596 = vmatprep.subr.mxu0 0.0
      %597 = vmatpush1.xpose.msra.mxu0 %v564
      %598 = vmatprep.subr.mxu0 0.0
      %599 = vmatpush1.xpose.msra.mxu0 %v561
      %600 = vmatprep.subr.mxu0 0.0
      %601 = vmatpush1.xpose.msra.mxu0 %v558
      %602 = vmatprep.subr.mxu0 0.0
      %603 = vmatpush1.xpose.msra.mxu0 %v555
      %604 = vmatprep.subr.mxu0 0.0
      %605 = vmatpush1.xpose.msra.mxu0 %v552
      %606 = vmatprep.subr.mxu0 0.0
      %607 = vmatpush1.xpose.msra.mxu0 %v549
      %608 = vmatprep.subr.mxu0 0.0
      %609 = vmatpush1.xpose.msra.mxu0 %v546
      %610 = vmatprep.subr.mxu0 0.0
      %611 = vmatpush1.xpose.msra.mxu0 %v543
      %612 = vmatprep.subr.mxu0 0.0
      %613 = vmatpush1.xpose.msra.mxu0 %v540
      %614 = vmatprep.subr.mxu0 0.0
      %615 = vmatpush1.xpose.msra.mxu0 %v537
      %616 = vmatprep.subr.mxu0 0.0
      %617 = vmatpush2.xpose.msra.mxu0 0.0
      %618 = vmatprep.subr.mxu0 0.0
      %619 = vmatpush2.xpose.msra.mxu0 0.0
      %620 = vmatprep.subr.mxu0 0.0
      %621 = vmatpush2.xpose.msra.mxu0 0.0
      %622 = vmatprep.subr.mxu0 0.0
      %623 = vmatpush2.xpose.msra.mxu0 0.0
      %624 = vmatprep.subr.mxu0 0.0
      %625 = vmatpush2.xpose.msra.mxu0 0.0
      %626 = vmatprep.subr.mxu0 0.0
      %627 = vmatpush2.xpose.msra.mxu0 0.0
      %628 = vmatprep.subr.mxu0 0.0
      %629 = vmatpush2.xpose.msra.mxu0 0.0
      %630 = vmatprep.subr.mxu0 0.0
      %631 = vmatpush2.xpose.msra.mxu0 0.0
      %632 = vmatprep.subr.mxu0 0.0
      %633 = vmatpush2.xpose.msra.mxu0 0.0
      %634 = vmatprep.subr.mxu0 0.0
      %635 = vmatpush2.xpose.msra.mxu0 0.0
      %636 = vmatprep.subr.mxu0 0.0
      %637 = vmatpush2.xpose.msra.mxu0 0.0
      %638 = vmatprep.subr.mxu0 0.0
      %639 = vmatpush2.xpose.msra.mxu0 0.0
      %640 = vmatprep.subr.mxu0 0.0
      %641 = vmatpush2.xpose.msra.mxu0 0.0
      %642 = vmatprep.subr.mxu0 0.0
      %643 = vmatpush2.xpose.msra.mxu0 0.0
      %644 = vmatprep.subr.mxu0 0.0
      %645 = vmatpush2.xpose.msra.mxu0 0.0
      %646 = vmatprep.subr.mxu0 0.0
      %647 = vmatpush2.xpose.msra.mxu0 0.0
      %648 = vmatprep.mubr.f32.mxu0 0.0
      %649 = vmatmul.mubr.f32.gmra.mxu0 %v489
      %v650 = vpop.f32.mrf.mxu0
      %v651 = vadd.f32 0.0, %v650
      %v652 = vpop.f32.mrf.mxu0
      %653 = vmatprep.mubr.f32.mxu0 0.0
      %654 = vmatmul.mubr.f32.gmra.mxu0 %v492
      %v655 = vpop.f32.mrf.mxu0
      %v656 = vadd.f32 0.0, %v655
      %v657 = vpop.f32.mrf.mxu0
      %658 = vmatprep.mubr.f32.mxu0 0.0
      %659 = vmatmul.mubr.f32.gmra.mxu0 %v495
      %v660 = vpop.f32.mrf.mxu0
      %v661 = vadd.f32 0.0, %v660
      %v662 = vpop.f32.mrf.mxu0
      %663 = vmatprep.mubr.f32.mxu0 0.0
      %664 = vmatmul.mubr.f32.gmra.mxu0 %v498
      %v665 = vpop.f32.mrf.mxu0
      %v666 = vadd.f32 0.0, %v665
      %v667 = vpop.f32.mrf.mxu0
      %668 = vmatprep.mubr.f32.mxu0 0.0
      %669 = vmatmul.mubr.f32.gmra.mxu0 %v501
      %v670 = vpop.f32.mrf.mxu0
      %v671 = vadd.f32 0.0, %v670
      %v672 = vpop.f32.mrf.mxu0
      %673 = vmatprep.mubr.f32.mxu0 0.0
      %674 = vmatmul.mubr.f32.gmra.mxu0 %v504
      %v675 = vpop.f32.mrf.mxu0
      %v676 = vadd.f32 0.0, %v675
      %v677 = vpop.f32.mrf.mxu0
      %678 = vmatprep.mubr.f32.mxu0 0.0
      %679 = vmatmul.mubr.f32.gmra.mxu0 %v507
      %v680 = vpop.f32.mrf.mxu0
      %v681 = vadd.f32 0.0, %v680
      %v682 = vpop.f32.mrf.mxu0
      %683 = vmatprep.mubr.f32.mxu0 0.0
      %684 = vmatmul.mubr.f32.gmra.mxu0 %v510
      %v685 = vpop.f32.mrf.mxu0
      %v686 = vadd.f32 0.0, %v685
      %v687 = vpop.f32.mrf.mxu0
      %688 = vmatprep.mubr.f32.mxu0 0.0
      %689 = vmatmul.mubr.f32.gmra.mxu0 %v513
      %v690 = vpop.f32.mrf.mxu0
      %v691 = vadd.f32 0.0, %v690
      %v692 = vpop.f32.mrf.mxu0
      %693 = vmatprep.mubr.f32.mxu0 0.0
      %694 = vmatmul.mubr.f32.gmra.mxu0 %v516
      %v695 = vpop.f32.mrf.mxu0
      %v696 = vadd.f32 0.0, %v695
      %v697 = vpop.f32.mrf.mxu0
      %698 = vmatprep.mubr.f32.mxu0 0.0
      %699 = vmatmul.mubr.f32.gmra.mxu0 %v519
      %v700 = vpop.f32.mrf.mxu0
      %v701 = vadd.f32 0.0, %v700
      %v702 = vpop.f32.mrf.mxu0
      %703 = vmatprep.mubr.f32.mxu0 0.0
      %704 = vmatmul.mubr.f32.gmra.mxu0 %v522
      %v705 = vpop.f32.mrf.mxu0
      %v706 = vadd.f32 0.0, %v705
      %v707 = vpop.f32.mrf.mxu0
      %708 = vmatprep.mubr.f32.mxu0 0.0
      %709 = vmatmul.mubr.f32.gmra.mxu0 %v525
      %v710 = vpop.f32.mrf.mxu0
      %v711 = vadd.f32 0.0, %v710
      %v712 = vpop.f32.mrf.mxu0
      %713 = vmatprep.mubr.f32.mxu0 0.0
      %714 = vmatmul.mubr.f32.gmra.mxu0 %v528
      %v715 = vpop.f32.mrf.mxu0
      %v716 = vadd.f32 0.0, %v715
      %v717 = vpop.f32.mrf.mxu0
      %718 = vmatprep.mubr.f32.mxu0 0.0
      %719 = vmatmul.mubr.f32.gmra.mxu0 %v531
      %v720 = vpop.f32.mrf.mxu0
      %v721 = vadd.f32 0.0, %v720
      %v722 = vpop.f32.mrf.mxu0
      %723 = vmatprep.mubr.f32.mxu0 0.0
      %724 = vmatmul.mubr.f32.gmra.mxu0 %v534
      %v725 = vpop.f32.mrf.mxu0
      %v726 = vadd.f32 0.0, %v725
      %v727 = vpop.f32.mrf.mxu0
      %728 = vdwg.mxu0
      %v730 = vsel %vm487, %v439, 0
      %v733 = vsel %vm487, %v440, 0
      %v736 = vsel %vm487, %v441, 0
      %v739 = vsel %vm487, %v442, 0
      %v742 = vsel %vm487, %v443, 0
      %v745 = vsel %vm487, %v444, 0
      %v748 = vsel %vm487, %v445, 0
      %v751 = vsel %vm487, %v446, 0
      %v754 = vsel %vm487, %v447, 0
      %v757 = vsel %vm487, %v448, 0
      %v760 = vsel %vm487, %v449, 0
      %v763 = vsel %vm487, %v450, 0
      %v766 = vsel %vm487, %v451, 0
      %v769 = vsel %vm487, %v452, 0
      %v772 = vsel %vm487, %v453, 0
      %v775 = vsel %vm487, %v454, 0
      %v778 = vsel %vm487, %v471, 0
      %v781 = vsel %vm487, %v472, 0
      %v784 = vsel %vm487, %v473, 0
      %v787 = vsel %vm487, %v474, 0
      %v790 = vsel %vm487, %v475, 0
      %v793 = vsel %vm487, %v476, 0
      %v796 = vsel %vm487, %v477, 0
      %v799 = vsel %vm487, %v478, 0
      %v802 = vsel %vm487, %v479, 0
      %v805 = vsel %vm487, %v480, 0
      %v808 = vsel %vm487, %v481, 0
      %v811 = vsel %vm487, %v482, 0
      %v814 = vsel %vm487, %v483, 0
      %v817 = vsel %vm487, %v484, 0
      %v820 = vsel %vm487, %v485, 0
      %v823 = vsel %vm487, %v486, 0
      %825 = vmatprep.subr.mxu0 0.0
      %826 = vmatpush1.xpose.msra.mxu0 %v823
      %827 = vmatprep.subr.mxu0 0.0
      %828 = vmatpush1.xpose.msra.mxu0 %v820
      %829 = vmatprep.subr.mxu0 0.0
      %830 = vmatpush1.xpose.msra.mxu0 %v817
      %831 = vmatprep.subr.mxu0 0.0
      %832 = vmatpush1.xpose.msra.mxu0 %v814
      %833 = vmatprep.subr.mxu0 0.0
      %834 = vmatpush1.xpose.msra.mxu0 %v811
      %835 = vmatprep.subr.mxu0 0.0
      %836 = vmatpush1.xpose.msra.mxu0 %v808
      %837 = vmatprep.subr.mxu0 0.0
      %838 = vmatpush1.xpose.msra.mxu0 %v805
      %839 = vmatprep.subr.mxu0 0.0
      %840 = vmatpush1.xpose.msra.mxu0 %v802
      %841 = vmatprep.subr.mxu0 0.0
      %842 = vmatpush1.xpose.msra.mxu0 %v799
      %843 = vmatprep.subr.mxu0 0.0
      %844 = vmatpush1.xpose.msra.mxu0 %v796
      %845 = vmatprep.subr.mxu0 0.0
      %846 = vmatpush1.xpose.msra.mxu0 %v793
      %847 = vmatprep.subr.mxu0 0.0
      %848 = vmatpush1.xpose.msra.mxu0 %v790
      %849 = vmatprep.subr.mxu0 0.0
      %850 = vmatpush1.xpose.msra.mxu0 %v787
      %851 = vmatprep.subr.mxu0 0.0
      %852 = vmatpush1.xpose.msra.mxu0 %v784
      %853 = vmatprep.subr.mxu0 0.0
      %854 = vmatpush1.xpose.msra.mxu0 %v781
      %855 = vmatprep.subr.mxu0 0.0
      %856 = vmatpush1.xpose.msra.mxu0 %v778
      %857 = vmatprep.subr.mxu0 0.0
      %858 = vmatpush2.xpose.msra.mxu0 0.0
      %859 = vmatprep.subr.mxu0 0.0
      %860 = vmatpush2.xpose.msra.mxu0 0.0
      %861 = vmatprep.subr.mxu0 0.0
      %862 = vmatpush2.xpose.msra.mxu0 0.0
      %863 = vmatprep.subr.mxu0 0.0
      %864 = vmatpush2.xpose.msra.mxu0 0.0
      %865 = vmatprep.subr.mxu0 0.0
      %866 = vmatpush2.xpose.msra.mxu0 0.0
      %867 = vmatprep.subr.mxu0 0.0
      %868 = vmatpush2.xpose.msra.mxu0 0.0
      %869 = vmatprep.subr.mxu0 0.0
      %870 = vmatpush2.xpose.msra.mxu0 0.0
      %871 = vmatprep.subr.mxu0 0.0
      %872 = vmatpush2.xpose.msra.mxu0 0.0
      %873 = vmatprep.subr.mxu0 0.0
      %874 = vmatpush2.xpose.msra.mxu0 0.0
      %875 = vmatprep.subr.mxu0 0.0
      %876 = vmatpush2.xpose.msra.mxu0 0.0
      %877 = vmatprep.subr.mxu0 0.0
      %878 = vmatpush2.xpose.msra.mxu0 0.0
      %879 = vmatprep.subr.mxu0 0.0
      %880 = vmatpush2.xpose.msra.mxu0 0.0
      %881 = vmatprep.subr.mxu0 0.0
      %882 = vmatpush2.xpose.msra.mxu0 0.0
      %883 = vmatprep.subr.mxu0 0.0
      %884 = vmatpush2.xpose.msra.mxu0 0.0
      %885 = vmatprep.subr.mxu0 0.0
      %886 = vmatpush2.xpose.msra.mxu0 0.0
      %887 = vmatprep.subr.mxu0 0.0
      %888 = vmatpush2.xpose.msra.mxu0 0.0
      %889 = vmatprep.mubr.f32.mxu0 0.0
      %890 = vmatmul.mubr.f32.gmra.mxu0 %v730
      %v891 = vpop.f32.mrf.mxu0
      %v892 = vadd.f32 0.0, %v891
      %v893 = vpop.f32.mrf.mxu0
      %894 = vmatprep.mubr.f32.mxu0 0.0
      %895 = vmatmul.mubr.f32.gmra.mxu0 %v733
      %v896 = vpop.f32.mrf.mxu0
      %v897 = vadd.f32 0.0, %v896
      %v898 = vpop.f32.mrf.mxu0
      %899 = vmatprep.mubr.f32.mxu0 0.0
      %900 = vmatmul.mubr.f32.gmra.mxu0 %v736
      %v901 = vpop.f32.mrf.mxu0
      %v902 = vadd.f32 0.0, %v901
      %v903 = vpop.f32.mrf.mxu0
      %904 = vmatprep.mubr.f32.mxu0 0.0
      %905 = vmatmul.mubr.f32.gmra.mxu0 %v739
      %v906 = vpop.f32.mrf.mxu0
      %v907 = vadd.f32 0.0, %v906
      %v908 = vpop.f32.mrf.mxu0
      %909 = vmatprep.mubr.f32.mxu0 0.0
      %910 = vmatmul.mubr.f32.gmra.mxu0 %v742
      %v911 = vpop.f32.mrf.mxu0
      %v912 = vadd.f32 0.0, %v911
      %v913 = vpop.f32.mrf.mxu0
      %914 = vmatprep.mubr.f32.mxu0 0.0
      %915 = vmatmul.mubr.f32.gmra.mxu0 %v745
      %v916 = vpop.f32.mrf.mxu0
      %v917 = vadd.f32 0.0, %v916
      %v918 = vpop.f32.mrf.mxu0
      %919 = vmatprep.mubr.f32.mxu0 0.0
      %920 = vmatmul.mubr.f32.gmra.mxu0 %v748
      %v921 = vpop.f32.mrf.mxu0
      %v922 = vadd.f32 0.0, %v921
      %v923 = vpop.f32.mrf.mxu0
      %924 = vmatprep.mubr.f32.mxu0 0.0
      %925 = vmatmul.mubr.f32.gmra.mxu0 %v751
      %v926 = vpop.f32.mrf.mxu0
      %v927 = vadd.f32 0.0, %v926
      %v928 = vpop.f32.mrf.mxu0
      %929 = vmatprep.mubr.f32.mxu0 0.0
      %930 = vmatmul.mubr.f32.gmra.mxu0 %v754
      %v931 = vpop.f32.mrf.mxu0
      %v932 = vadd.f32 0.0, %v931
      %v933 = vpop.f32.mrf.mxu0
      %934 = vmatprep.mubr.f32.mxu0 0.0
      %935 = vmatmul.mubr.f32.gmra.mxu0 %v757
      %v936 = vpop.f32.mrf.mxu0
      %v937 = vadd.f32 0.0, %v936
      %v938 = vpop.f32.mrf.mxu0
      %939 = vmatprep.mubr.f32.mxu0 0.0
      %940 = vmatmul.mubr.f32.gmra.mxu0 %v760
      %v941 = vpop.f32.mrf.mxu0
      %v942 = vadd.f32 0.0, %v941
      %v943 = vpop.f32.mrf.mxu0
      %944 = vmatprep.mubr.f32.mxu0 0.0
      %945 = vmatmul.mubr.f32.gmra.mxu0 %v763
      %v946 = vpop.f32.mrf.mxu0
      %v947 = vadd.f32 0.0, %v946
      %v948 = vpop.f32.mrf.mxu0
      %949 = vmatprep.mubr.f32.mxu0 0.0
      %950 = vmatmul.mubr.f32.gmra.mxu0 %v766
      %v951 = vpop.f32.mrf.mxu0
      %v952 = vadd.f32 0.0, %v951
      %v953 = vpop.f32.mrf.mxu0
      %954 = vmatprep.mubr.f32.mxu0 0.0
      %955 = vmatmul.mubr.f32.gmra.mxu0 %v769
      %v956 = vpop.f32.mrf.mxu0
      %v957 = vadd.f32 0.0, %v956
      %v958 = vpop.f32.mrf.mxu0
      %959 = vmatprep.mubr.f32.mxu0 0.0
      %960 = vmatmul.mubr.f32.gmra.mxu0 %v772
      %v961 = vpop.f32.mrf.mxu0
      %v962 = vadd.f32 0.0, %v961
      %v963 = vpop.f32.mrf.mxu0
      %964 = vmatprep.mubr.f32.mxu0 0.0
      %965 = vmatmul.mubr.f32.gmra.mxu0 %v775
      %v966 = vpop.f32.mrf.mxu0
      %v967 = vadd.f32 0.0, %v966
      %v968 = vpop.f32.mrf.mxu0
      %969 = vdwg.mxu0
      %s970 = smul.u32 %s21, 128
      %v971 = vlaneseq
      %v972 = vand.u32 %v971, 127
      %v973 = vstv %s970
      %v974 = vadd.s32 %v973, %v972
      %vm975 = vcmp.lt.s32.totalorder %v974, 8
      %v976 = vsel %vm975, 1, 0
      %vm977 = vcmp.eq.s32.totalorder %v976, 1
      %v978 = vsel %vm977, %v651, -1e+09
      %v979 = vsel %vm977, %v656, -1e+09
      %v980 = vsel %vm977, %v661, -1e+09
      %v981 = vsel %vm977, %v666, -1e+09
      %v982 = vsel %vm977, %v671, -1e+09
      %v983 = vsel %vm977, %v676, -1e+09
      %v984 = vsel %vm977, %v681, -1e+09
      %v985 = vsel %vm977, %v686, -1e+09
      %v986 = vsel %vm977, %v691, -1e+09
      %v987 = vsel %vm977, %v696, -1e+09
      %v988 = vsel %vm977, %v701, -1e+09
      %v989 = vsel %vm977, %v706, -1e+09
      %v990 = vsel %vm977, %v711, -1e+09
      %v991 = vsel %vm977, %v716, -1e+09
      %v992 = vsel %vm977, %v721, -1e+09
      %v993 = vsel %vm977, %v726, -1e+09
      %v994 = vsel %vm977, %v892, -1e+09
      %v995 = vsel %vm977, %v897, -1e+09
      %v996 = vsel %vm977, %v902, -1e+09
      %v997 = vsel %vm977, %v907, -1e+09
      %v998 = vsel %vm977, %v912, -1e+09
      %v999 = vsel %vm977, %v917, -1e+09
      %v1000 = vsel %vm977, %v922, -1e+09
      %v1001 = vsel %vm977, %v927, -1e+09
      %v1002 = vsel %vm977, %v932, -1e+09
      %v1003 = vsel %vm977, %v937, -1e+09
      %v1004 = vsel %vm977, %v942, -1e+09
      %v1005 = vsel %vm977, %v947, -1e+09
      %v1006 = vsel %vm977, %v952, -1e+09
      %v1007 = vsel %vm977, %v957, -1e+09
      %v1008 = vsel %vm977, %v962, -1e+09
      %v1009 = vsel %vm977, %v967, -1e+09
      %v1010 = vld [vmem:[#allocation2] sm:$0xff]
      %v1011 = vld [vmem:[#allocation2 + $0x8] sm:$0xff]
      %v1012 = vld [vmem:[#allocation2 + $0x10] sm:$0xff]
      %v1013 = vld [vmem:[#allocation2 + $0x18] sm:$0xff]
      %v1014 = vld [vmem:[#allocation2 + $0x20] sm:$0xff]
      %v1015 = vld [vmem:[#allocation2 + $0x28] sm:$0xff]
      %v1016 = vld [vmem:[#allocation2 + $0x30] sm:$0xff]
      %v1017 = vld [vmem:[#allocation2 + $0x38] sm:$0xff]
      %v1018 = vld [vmem:[#allocation2 + $0x40] sm:$0xff]
      %v1019 = vld [vmem:[#allocation2 + $0x48] sm:$0xff]
      %v1020 = vld [vmem:[#allocation2 + $0x50] sm:$0xff]
      %v1021 = vld [vmem:[#allocation2 + $0x58] sm:$0xff]
      %v1022 = vld [vmem:[#allocation2 + $0x60] sm:$0xff]
      %v1023 = vld [vmem:[#allocation2 + $0x68] sm:$0xff]
      %v1024 = vld [vmem:[#allocation2 + $0x70] sm:$0xff]
      %v1025 = vld [vmem:[#allocation2 + $0x78] sm:$0xff]
      %v1026 = vld [vmem:[#allocation2 + $0x80] sm:$0xff]
      %v1027 = vld [vmem:[#allocation2 + $0x88] sm:$0xff]
      %v1028 = vld [vmem:[#allocation2 + $0x90] sm:$0xff]
      %v1029 = vld [vmem:[#allocation2 + $0x98] sm:$0xff]
      %v1030 = vld [vmem:[#allocation2 + $0xa0] sm:$0xff]
      %v1031 = vld [vmem:[#allocation2 + $0xa8] sm:$0xff]
      %v1032 = vld [vmem:[#allocation2 + $0xb0] sm:$0xff]
      %v1033 = vld [vmem:[#allocation2 + $0xb8] sm:$0xff]
      %v1034 = vld [vmem:[#allocation2 + $0xc0] sm:$0xff]
      %v1035 = vld [vmem:[#allocation2 + $0xc8] sm:$0xff]
      %v1036 = vld [vmem:[#allocation2 + $0xd0] sm:$0xff]
      %v1037 = vld [vmem:[#allocation2 + $0xd8] sm:$0xff]
      %v1038 = vld [vmem:[#allocation2 + $0xe0] sm:$0xff]
      %v1039 = vld [vmem:[#allocation2 + $0xe8] sm:$0xff]
      %v1040 = vld [vmem:[#allocation2 + $0xf0] sm:$0xff]
      %v1041 = vld [vmem:[#allocation2 + $0xf8] sm:$0xff]
      %1042 = vmax.xlane.f32.xlu0 %v978
      %v1043 = vpop.xlane.xlu0 %1042
      %1044 = vmax.xlane.f32.xlu0 %v979
      %v1045 = vpop.xlane.xlu0 %1044
      %1046 = vmax.xlane.f32.xlu0 %v980
      %v1047 = vpop.xlane.xlu0 %1046
      %1048 = vmax.xlane.f32.xlu0 %v981
      %v1049 = vpop.xlane.xlu0 %1048
      %1050 = vmax.xlane.f32.xlu0 %v982
      %v1051 = vpop.xlane.xlu0 %1050
      %1052 = vmax.xlane.f32.xlu0 %v983
      %v1053 = vpop.xlane.xlu0 %1052
      %1054 = vmax.xlane.f32.xlu0 %v984
      %v1055 = vpop.xlane.xlu0 %1054
      %1056 = vmax.xlane.f32.xlu0 %v985
      %v1057 = vpop.xlane.xlu0 %1056
      %1058 = vmax.xlane.f32.xlu0 %v986
      %v1059 = vpop.xlane.xlu0 %1058
      %1060 = vmax.xlane.f32.xlu0 %v987
      %v1061 = vpop.xlane.xlu0 %1060
      %1062 = vmax.xlane.f32.xlu0 %v988
      %v1063 = vpop.xlane.xlu0 %1062
      %1064 = vmax.xlane.f32.xlu0 %v989
      %v1065 = vpop.xlane.xlu0 %1064
      %1066 = vmax.xlane.f32.xlu0 %v990
      %v1067 = vpop.xlane.xlu0 %1066
      %1068 = vmax.xlane.f32.xlu0 %v991
      %v1069 = vpop.xlane.xlu0 %1068
      %1070 = vmax.xlane.f32.xlu0 %v992
      %v1071 = vpop.xlane.xlu0 %1070
      %1072 = vmax.xlane.f32.xlu0 %v993
      %v1073 = vpop.xlane.xlu0 %1072
      %1074 = vmax.xlane.f32.xlu0 %v994
      %v1075 = vpop.xlane.xlu0 %1074
      %1076 = vmax.xlane.f32.xlu0 %v995
      %v1077 = vpop.xlane.xlu0 %1076
      %1078 = vmax.xlane.f32.xlu0 %v996
      %v1079 = vpop.xlane.xlu0 %1078
      %1080 = vmax.xlane.f32.xlu0 %v997
      %v1081 = vpop.xlane.xlu0 %1080
      %1082 = vmax.xlane.f32.xlu0 %v998
      %v1083 = vpop.xlane.xlu0 %1082
      %1084 = vmax.xlane.f32.xlu0 %v999
      %v1085 = vpop.xlane.xlu0 %1084
      %1086 = vmax.xlane.f32.xlu0 %v1000
      %v1087 = vpop.xlane.xlu0 %1086
      %1088 = vmax.xlane.f32.xlu0 %v1001
      %v1089 = vpop.xlane.xlu0 %1088
      %1090 = vmax.xlane.f32.xlu0 %v1002
      %v1091 = vpop.xlane.xlu0 %1090
      %1092 = vmax.xlane.f32.xlu0 %v1003
      %v1093 = vpop.xlane.xlu0 %1092
      %1094 = vmax.xlane.f32.xlu0 %v1004
      %v1095 = vpop.xlane.xlu0 %1094
      %1096 = vmax.xlane.f32.xlu0 %v1005
      %v1097 = vpop.xlane.xlu0 %1096
      %1098 = vmax.xlane.f32.xlu0 %v1006
      %v1099 = vpop.xlane.xlu0 %1098
      %1100 = vmax.xlane.f32.xlu0 %v1007
      %v1101 = vpop.xlane.xlu0 %1100
      %1102 = vmax.xlane.f32.xlu0 %v1008
      %v1103 = vpop.xlane.xlu0 %1102
      %1104 = vmax.xlane.f32.xlu0 %v1009
      %v1105 = vpop.xlane.xlu0 %1104
      %v1106 = vmax.f32 %v1010, %v1043
      %v1107 = vmax.f32 %v1011, %v1045
      %v1108 = vmax.f32 %v1012, %v1047
      %v1109 = vmax.f32 %v1013, %v1049
      %v1110 = vmax.f32 %v1014, %v1051
      %v1111 = vmax.f32 %v1015, %v1053
      %v1112 = vmax.f32 %v1016, %v1055
      %v1113 = vmax.f32 %v1017, %v1057
      %v1114 = vmax.f32 %v1018, %v1059
      %v1115 = vmax.f32 %v1019, %v1061
      %v1116 = vmax.f32 %v1020, %v1063
      %v1117 = vmax.f32 %v1021, %v1065
      %v1118 = vmax.f32 %v1022, %v1067
      %v1119 = vmax.f32 %v1023, %v1069
      %v1120 = vmax.f32 %v1024, %v1071
      %v1121 = vmax.f32 %v1025, %v1073
      %v1122 = vmax.f32 %v1026, %v1075
      %v1123 = vmax.f32 %v1027, %v1077
      %v1124 = vmax.f32 %v1028, %v1079
      %v1125 = vmax.f32 %v1029, %v1081
      %v1126 = vmax.f32 %v1030, %v1083
      %v1127 = vmax.f32 %v1031, %v1085
      %v1128 = vmax.f32 %v1032, %v1087
      %v1129 = vmax.f32 %v1033, %v1089
      %v1130 = vmax.f32 %v1034, %v1091
      %v1131 = vmax.f32 %v1035, %v1093
      %v1132 = vmax.f32 %v1036, %v1095
      %v1133 = vmax.f32 %v1037, %v1097
      %v1134 = vmax.f32 %v1038, %v1099
      %v1135 = vmax.f32 %v1039, %v1101
      %v1136 = vmax.f32 %v1040, %v1103
      %v1137 = vmax.f32 %v1041, %v1105
      %v1138 = vsub.f32 %v1010, %v1106
      %v1139 = vsub.f32 %v1011, %v1107
      %v1140 = vsub.f32 %v1012, %v1108
      %v1141 = vsub.f32 %v1013, %v1109
      %v1142 = vsub.f32 %v1014, %v1110
      %v1143 = vsub.f32 %v1015, %v1111
      %v1144 = vsub.f32 %v1016, %v1112
      %v1145 = vsub.f32 %v1017, %v1113
      %v1146 = vsub.f32 %v1018, %v1114
      %v1147 = vsub.f32 %v1019, %v1115
      %v1148 = vsub.f32 %v1020, %v1116
      %v1149 = vsub.f32 %v1021, %v1117
      %v1150 = vsub.f32 %v1022, %v1118
      %v1151 = vsub.f32 %v1023, %v1119
      %v1152 = vsub.f32 %v1024, %v1120
      %v1153 = vsub.f32 %v1025, %v1121
      %v1154 = vsub.f32 %v1026, %v1122
      %v1155 = vsub.f32 %v1027, %v1123
      %v1156 = vsub.f32 %v1028, %v1124
      %v1157 = vsub.f32 %v1029, %v1125
      %v1158 = vsub.f32 %v1030, %v1126
      %v1159 = vsub.f32 %v1031, %v1127
      %v1160 = vsub.f32 %v1032, %v1128
      %v1161 = vsub.f32 %v1033, %v1129
      %v1162 = vsub.f32 %v1034, %v1130
      %v1163 = vsub.f32 %v1035, %v1131
      %v1164 = vsub.f32 %v1036, %v1132
      %v1165 = vsub.f32 %v1037, %v1133
      %v1166 = vsub.f32 %v1038, %v1134
      %v1167 = vsub.f32 %v1039, %v1135
      %v1168 = vsub.f32 %v1040, %v1136
      %v1169 = vsub.f32 %v1041, %v1137
      %v1170 = vmul.f32 %v1138, 1.442695
      %v1171 = vpow.pop %v1170
      %v1172 = vmul.f32 %v1139, 1.442695
      %v1173 = vpow.pop %v1172
      %v1174 = vmul.f32 %v1140, 1.442695
      %v1175 = vpow.pop %v1174
      %v1176 = vmul.f32 %v1141, 1.442695
      %v1177 = vpow.pop %v1176
      %v1178 = vmul.f32 %v1142, 1.442695
      %v1179 = vpow.pop %v1178
      %v1180 = vmul.f32 %v1143, 1.442695
      %v1181 = vpow.pop %v1180
      %v1182 = vmul.f32 %v1144, 1.442695
      %v1183 = vpow.pop %v1182
      %v1184 = vmul.f32 %v1145, 1.442695
      %v1185 = vpow.pop %v1184
      %v1186 = vmul.f32 %v1146, 1.442695
      %v1187 = vpow.pop %v1186
      %v1188 = vmul.f32 %v1147, 1.442695
      %v1189 = vpow.pop %v1188
      %v1190 = vmul.f32 %v1148, 1.442695
      %v1191 = vpow.pop %v1190
      %v1192 = vmul.f32 %v1149, 1.442695
      %v1193 = vpow.pop %v1192
      %v1194 = vmul.f32 %v1150, 1.442695
      %v1195 = vpow.pop %v1194
      %v1196 = vmul.f32 %v1151, 1.442695
      %v1197 = vpow.pop %v1196
      %v1198 = vmul.f32 %v1152, 1.442695
      %v1199 = vpow.pop %v1198
      %v1200 = vmul.f32 %v1153, 1.442695
      %v1201 = vpow.pop %v1200
      %v1202 = vmul.f32 %v1154, 1.442695
      %v1203 = vpow.pop %v1202
      %v1204 = vmul.f32 %v1155, 1.442695
      %v1205 = vpow.pop %v1204
      %v1206 = vmul.f32 %v1156, 1.442695
      %v1207 = vpow.pop %v1206
      %v1208 = vmul.f32 %v1157, 1.442695
      %v1209 = vpow.pop %v1208
      %v1210 = vmul.f32 %v1158, 1.442695
      %v1211 = vpow.pop %v1210
      %v1212 = vmul.f32 %v1159, 1.442695
      %v1213 = vpow.pop %v1212
      %v1214 = vmul.f32 %v1160, 1.442695
      %v1215 = vpow.pop %v1214
      %v1216 = vmul.f32 %v1161, 1.442695
      %v1217 = vpow.pop %v1216
      %v1218 = vmul.f32 %v1162, 1.442695
      %v1219 = vpow.pop %v1218
      %v1220 = vmul.f32 %v1163, 1.442695
      %v1221 = vpow.pop %v1220
      %v1222 = vmul.f32 %v1164, 1.442695
      %v1223 = vpow.pop %v1222
      %v1224 = vmul.f32 %v1165, 1.442695
      %v1225 = vpow.pop %v1224
      %v1226 = vmul.f32 %v1166, 1.442695
      %v1227 = vpow.pop %v1226
      %v1228 = vmul.f32 %v1167, 1.442695
      %v1229 = vpow.pop %v1228
      %v1230 = vmul.f32 %v1168, 1.442695
      %v1231 = vpow.pop %v1230
      %v1232 = vmul.f32 %v1169, 1.442695
      %v1233 = vpow.pop %v1232
      %1235 = vset.pattern.permute.xlu0 0
      %1236 = vperm.xlu0 %1235, %v1106
      %v1237 = vpop.permute.xlu0 %1236
      %1240 = vset.pattern.permute.xlu0 0
      %1241 = vperm.xlu0 %1240, %v1107
      %v1242 = vpop.permute.xlu0 %1241
      %1245 = vset.pattern.permute.xlu0 0
      %1246 = vperm.xlu0 %1245, %v1108
      %v1247 = vpop.permute.xlu0 %1246
      %1250 = vset.pattern.permute.xlu0 0
      %1251 = vperm.xlu0 %1250, %v1109
      %v1252 = vpop.permute.xlu0 %1251
      %1255 = vset.pattern.permute.xlu0 0
      %1256 = vperm.xlu0 %1255, %v1110
      %v1257 = vpop.permute.xlu0 %1256
      %1260 = vset.pattern.permute.xlu0 0
      %1261 = vperm.xlu0 %1260, %v1111
      %v1262 = vpop.permute.xlu0 %1261
      %1265 = vset.pattern.permute.xlu0 0
      %1266 = vperm.xlu0 %1265, %v1112
      %v1267 = vpop.permute.xlu0 %1266
      %1270 = vset.pattern.permute.xlu0 0
      %1271 = vperm.xlu0 %1270, %v1113
      %v1272 = vpop.permute.xlu0 %1271
      %1275 = vset.pattern.permute.xlu0 0
      %1276 = vperm.xlu0 %1275, %v1114
      %v1277 = vpop.permute.xlu0 %1276
      %1280 = vset.pattern.permute.xlu0 0
      %1281 = vperm.xlu0 %1280, %v1115
      %v1282 = vpop.permute.xlu0 %1281
      %1285 = vset.pattern.permute.xlu0 0
      %1286 = vperm.xlu0 %1285, %v1116
      %v1287 = vpop.permute.xlu0 %1286
      %1290 = vset.pattern.permute.xlu0 0
      %1291 = vperm.xlu0 %1290, %v1117
      %v1292 = vpop.permute.xlu0 %1291
      %1295 = vset.pattern.permute.xlu0 0
      %1296 = vperm.xlu0 %1295, %v1118
      %v1297 = vpop.permute.xlu0 %1296
      %1300 = vset.pattern.permute.xlu0 0
      %1301 = vperm.xlu0 %1300, %v1119
      %v1302 = vpop.permute.xlu0 %1301
      %1305 = vset.pattern.permute.xlu0 0
      %1306 = vperm.xlu0 %1305, %v1120
      %v1307 = vpop.permute.xlu0 %1306
      %1310 = vset.pattern.permute.xlu0 0
      %1311 = vperm.xlu0 %1310, %v1121
      %v1312 = vpop.permute.xlu0 %1311
      %1315 = vset.pattern.permute.xlu0 0
      %1316 = vperm.xlu0 %1315, %v1122
      %v1317 = vpop.permute.xlu0 %1316
      %1320 = vset.pattern.permute.xlu0 0
      %1321 = vperm.xlu0 %1320, %v1123
      %v1322 = vpop.permute.xlu0 %1321
      %1325 = vset.pattern.permute.xlu0 0
      %1326 = vperm.xlu0 %1325, %v1124
      %v1327 = vpop.permute.xlu0 %1326
      %1330 = vset.pattern.permute.xlu0 0
      %1331 = vperm.xlu0 %1330, %v1125
      %v1332 = vpop.permute.xlu0 %1331
      %1335 = vset.pattern.permute.xlu0 0
      %1336 = vperm.xlu0 %1335, %v1126
      %v1337 = vpop.permute.xlu0 %1336
      %1340 = vset.pattern.permute.xlu0 0
      %1341 = vperm.xlu0 %1340, %v1127
      %v1342 = vpop.permute.xlu0 %1341
      %1345 = vset.pattern.permute.xlu0 0
      %1346 = vperm.xlu0 %1345, %v1128
      %v1347 = vpop.permute.xlu0 %1346
      %1350 = vset.pattern.permute.xlu0 0
      %1351 = vperm.xlu0 %1350, %v1129
      %v1352 = vpop.permute.xlu0 %1351
      %1355 = vset.pattern.permute.xlu0 0
      %1356 = vperm.xlu0 %1355, %v1130
      %v1357 = vpop.permute.xlu0 %1356
      %1360 = vset.pattern.permute.xlu0 0
      %1361 = vperm.xlu0 %1360, %v1131
      %v1362 = vpop.permute.xlu0 %1361
      %1365 = vset.pattern.permute.xlu0 0
      %1366 = vperm.xlu0 %1365, %v1132
      %v1367 = vpop.permute.xlu0 %1366
      %1370 = vset.pattern.permute.xlu0 0
      %1371 = vperm.xlu0 %1370, %v1133
      %v1372 = vpop.permute.xlu0 %1371
      %1375 = vset.pattern.permute.xlu0 0
      %1376 = vperm.xlu0 %1375, %v1134
      %v1377 = vpop.permute.xlu0 %1376
      %1380 = vset.pattern.permute.xlu0 0
      %1381 = vperm.xlu0 %1380, %v1135
      %v1382 = vpop.permute.xlu0 %1381
      %1385 = vset.pattern.permute.xlu0 0
      %1386 = vperm.xlu0 %1385, %v1136
      %v1387 = vpop.permute.xlu0 %1386
      %1390 = vset.pattern.permute.xlu0 0
      %1391 = vperm.xlu0 %1390, %v1137
      %v1392 = vpop.permute.xlu0 %1391
      %v1394 = vsub.f32 %v978, %v1237
      %v1395 = vsub.f32 %v979, %v1242
      %v1396 = vsub.f32 %v980, %v1247
      %v1397 = vsub.f32 %v981, %v1252
      %v1398 = vsub.f32 %v982, %v1257
      %v1399 = vsub.f32 %v983, %v1262
      %v1400 = vsub.f32 %v984, %v1267
      %v1401 = vsub.f32 %v985, %v1272
      %v1402 = vsub.f32 %v986, %v1277
      %v1403 = vsub.f32 %v987, %v1282
      %v1404 = vsub.f32 %v988, %v1287
      %v1405 = vsub.f32 %v989, %v1292
      %v1406 = vsub.f32 %v990, %v1297
      %v1407 = vsub.f32 %v991, %v1302
      %v1408 = vsub.f32 %v992, %v1307
      %v1409 = vsub.f32 %v993, %v1312
      %v1410 = vsub.f32 %v994, %v1317
      %v1411 = vsub.f32 %v995, %v1322
      %v1412 = vsub.f32 %v996, %v1327
      %v1413 = vsub.f32 %v997, %v1332
      %v1414 = vsub.f32 %v998, %v1337
      %v1415 = vsub.f32 %v999, %v1342
      %v1416 = vsub.f32 %v1000, %v1347
      %v1417 = vsub.f32 %v1001, %v1352
      %v1418 = vsub.f32 %v1002, %v1357
      %v1419 = vsub.f32 %v1003, %v1362
      %v1420 = vsub.f32 %v1004, %v1367
      %v1421 = vsub.f32 %v1005, %v1372
      %v1422 = vsub.f32 %v1006, %v1377
      %v1423 = vsub.f32 %v1007, %v1382
      %v1424 = vsub.f32 %v1008, %v1387
      %v1425 = vsub.f32 %v1009, %v1392
      %v1426 = vmul.f32 %v1394, 1.442695
      %v1427 = vpow.pop %v1426
      %v1428 = vmul.f32 %v1395, 1.442695
      %v1429 = vpow.pop %v1428
      %v1430 = vmul.f32 %v1396, 1.442695
      %v1431 = vpow.pop %v1430
      %v1432 = vmul.f32 %v1397, 1.442695
      %v1433 = vpow.pop %v1432
      %v1434 = vmul.f32 %v1398, 1.442695
      %v1435 = vpow.pop %v1434
      %v1436 = vmul.f32 %v1399, 1.442695
      %v1437 = vpow.pop %v1436
      %v1438 = vmul.f32 %v1400, 1.442695
      %v1439 = vpow.pop %v1438
      %v1440 = vmul.f32 %v1401, 1.442695
      %v1441 = vpow.pop %v1440
      %v1442 = vmul.f32 %v1402, 1.442695
      %v1443 = vpow.pop %v1442
      %v1444 = vmul.f32 %v1403, 1.442695
      %v1445 = vpow.pop %v1444
      %v1446 = vmul.f32 %v1404, 1.442695
      %v1447 = vpow.pop %v1446
      %v1448 = vmul.f32 %v1405, 1.442695
      %v1449 = vpow.pop %v1448
      %v1450 = vmul.f32 %v1406, 1.442695
      %v1451 = vpow.pop %v1450
      %v1452 = vmul.f32 %v1407, 1.442695
      %v1453 = vpow.pop %v1452
      %v1454 = vmul.f32 %v1408, 1.442695
      %v1455 = vpow.pop %v1454
      %v1456 = vmul.f32 %v1409, 1.442695
      %v1457 = vpow.pop %v1456
      %v1458 = vmul.f32 %v1410, 1.442695
      %v1459 = vpow.pop %v1458
      %v1460 = vmul.f32 %v1411, 1.442695
      %v1461 = vpow.pop %v1460
      %v1462 = vmul.f32 %v1412, 1.442695
      %v1463 = vpow.pop %v1462
      %v1464 = vmul.f32 %v1413, 1.442695
      %v1465 = vpow.pop %v1464
      %v1466 = vmul.f32 %v1414, 1.442695
      %v1467 = vpow.pop %v1466
      %v1468 = vmul.f32 %v1415, 1.442695
      %v1469 = vpow.pop %v1468
      %v1470 = vmul.f32 %v1416, 1.442695
      %v1471 = vpow.pop %v1470
      %v1472 = vmul.f32 %v1417, 1.442695
      %v1473 = vpow.pop %v1472
      %v1474 = vmul.f32 %v1418, 1.442695
      %v1475 = vpow.pop %v1474
      %v1476 = vmul.f32 %v1419, 1.442695
      %v1477 = vpow.pop %v1476
      %v1478 = vmul.f32 %v1420, 1.442695
      %v1479 = vpow.pop %v1478
      %v1480 = vmul.f32 %v1421, 1.442695
      %v1481 = vpow.pop %v1480
      %v1482 = vmul.f32 %v1422, 1.442695
      %v1483 = vpow.pop %v1482
      %v1484 = vmul.f32 %v1423, 1.442695
      %v1485 = vpow.pop %v1484
      %v1486 = vmul.f32 %v1424, 1.442695
      %v1487 = vpow.pop %v1486
      %v1488 = vmul.f32 %v1425, 1.442695
      %v1489 = vpow.pop %v1488
      %v1490 = vld [vmem:[#allocation3] sm:$0xff]
      %v1491 = vld [vmem:[#allocation3 + $0x8] sm:$0xff]
      %v1492 = vld [vmem:[#allocation3 + $0x10] sm:$0xff]
      %v1493 = vld [vmem:[#allocation3 + $0x18] sm:$0xff]
      %v1494 = vld [vmem:[#allocation3 + $0x20] sm:$0xff]
      %v1495 = vld [vmem:[#allocation3 + $0x28] sm:$0xff]
      %v1496 = vld [vmem:[#allocation3 + $0x30] sm:$0xff]
      %v1497 = vld [vmem:[#allocation3 + $0x38] sm:$0xff]
      %v1498 = vld [vmem:[#allocation3 + $0x40] sm:$0xff]
      %v1499 = vld [vmem:[#allocation3 + $0x48] sm:$0xff]
      %v1500 = vld [vmem:[#allocation3 + $0x50] sm:$0xff]
      %v1501 = vld [vmem:[#allocation3 + $0x58] sm:$0xff]
      %v1502 = vld [vmem:[#allocation3 + $0x60] sm:$0xff]
      %v1503 = vld [vmem:[#allocation3 + $0x68] sm:$0xff]
      %v1504 = vld [vmem:[#allocation3 + $0x70] sm:$0xff]
      %v1505 = vld [vmem:[#allocation3 + $0x78] sm:$0xff]
      %v1506 = vld [vmem:[#allocation3 + $0x80] sm:$0xff]
      %v1507 = vld [vmem:[#allocation3 + $0x88] sm:$0xff]
      %v1508 = vld [vmem:[#allocation3 + $0x90] sm:$0xff]
      %v1509 = vld [vmem:[#allocation3 + $0x98] sm:$0xff]
      %v1510 = vld [vmem:[#allocation3 + $0xa0] sm:$0xff]
      %v1511 = vld [vmem:[#allocation3 + $0xa8] sm:$0xff]
      %v1512 = vld [vmem:[#allocation3 + $0xb0] sm:$0xff]
      %v1513 = vld [vmem:[#allocation3 + $0xb8] sm:$0xff]
      %v1514 = vld [vmem:[#allocation3 + $0xc0] sm:$0xff]
      %v1515 = vld [vmem:[#allocation3 + $0xc8] sm:$0xff]
      %v1516 = vld [vmem:[#allocation3 + $0xd0] sm:$0xff]
      %v1517 = vld [vmem:[#allocation3 + $0xd8] sm:$0xff]
      %v1518 = vld [vmem:[#allocation3 + $0xe0] sm:$0xff]
      %v1519 = vld [vmem:[#allocation3 + $0xe8] sm:$0xff]
      %v1520 = vld [vmem:[#allocation3 + $0xf0] sm:$0xff]
      %v1521 = vld [vmem:[#allocation3 + $0xf8] sm:$0xff]
      %v1522 = vmul.f32 %v1171, %v1490
      %v1523 = vmul.f32 %v1173, %v1491
      %v1524 = vmul.f32 %v1175, %v1492
      %v1525 = vmul.f32 %v1177, %v1493
      %v1526 = vmul.f32 %v1179, %v1494
      %v1527 = vmul.f32 %v1181, %v1495
      %v1528 = vmul.f32 %v1183, %v1496
      %v1529 = vmul.f32 %v1185, %v1497
      %v1530 = vmul.f32 %v1187, %v1498
      %v1531 = vmul.f32 %v1189, %v1499
      %v1532 = vmul.f32 %v1191, %v1500
      %v1533 = vmul.f32 %v1193, %v1501
      %v1534 = vmul.f32 %v1195, %v1502
      %v1535 = vmul.f32 %v1197, %v1503
      %v1536 = vmul.f32 %v1199, %v1504
      %v1537 = vmul.f32 %v1201, %v1505
      %v1538 = vmul.f32 %v1203, %v1506
      %v1539 = vmul.f32 %v1205, %v1507
      %v1540 = vmul.f32 %v1207, %v1508
      %v1541 = vmul.f32 %v1209, %v1509
      %v1542 = vmul.f32 %v1211, %v1510
      %v1543 = vmul.f32 %v1213, %v1511
      %v1544 = vmul.f32 %v1215, %v1512
      %v1545 = vmul.f32 %v1217, %v1513
      %v1546 = vmul.f32 %v1219, %v1514
      %v1547 = vmul.f32 %v1221, %v1515
      %v1548 = vmul.f32 %v1223, %v1516
      %v1549 = vmul.f32 %v1225, %v1517
      %v1550 = vmul.f32 %v1227, %v1518
      %v1551 = vmul.f32 %v1229, %v1519
      %v1552 = vmul.f32 %v1231, %v1520
      %v1553 = vmul.f32 %v1233, %v1521
      %1554 = vadd.xlane.f32.xlu0 %v1427
      %v1555 = vpop.xlane.xlu0 %1554
      %1556 = vadd.xlane.f32.xlu0 %v1429
      %v1557 = vpop.xlane.xlu0 %1556
      %1558 = vadd.xlane.f32.xlu0 %v1431
      %v1559 = vpop.xlane.xlu0 %1558
      %1560 = vadd.xlane.f32.xlu0 %v1433
      %v1561 = vpop.xlane.xlu0 %1560
      %1562 = vadd.xlane.f32.xlu0 %v1435
      %v1563 = vpop.xlane.xlu0 %1562
      %1564 = vadd.xlane.f32.xlu0 %v1437
      %v1565 = vpop.xlane.xlu0 %1564
      %1566 = vadd.xlane.f32.xlu0 %v1439
      %v1567 = vpop.xlane.xlu0 %1566
      %1568 = vadd.xlane.f32.xlu0 %v1441
      %v1569 = vpop.xlane.xlu0 %1568
      %1570 = vadd.xlane.f32.xlu0 %v1443
      %v1571 = vpop.xlane.xlu0 %1570
      %1572 = vadd.xlane.f32.xlu0 %v1445
      %v1573 = vpop.xlane.xlu0 %1572
      %1574 = vadd.xlane.f32.xlu0 %v1447
      %v1575 = vpop.xlane.xlu0 %1574
      %1576 = vadd.xlane.f32.xlu0 %v1449
      %v1577 = vpop.xlane.xlu0 %1576
      %1578 = vadd.xlane.f32.xlu0 %v1451
      %v1579 = vpop.xlane.xlu0 %1578
      %1580 = vadd.xlane.f32.xlu0 %v1453
      %v1581 = vpop.xlane.xlu0 %1580
      %1582 = vadd.xlane.f32.xlu0 %v1455
      %v1583 = vpop.xlane.xlu0 %1582
      %1584 = vadd.xlane.f32.xlu0 %v1457
      %v1585 = vpop.xlane.xlu0 %1584
      %1586 = vadd.xlane.f32.xlu0 %v1459
      %v1587 = vpop.xlane.xlu0 %1586
      %1588 = vadd.xlane.f32.xlu0 %v1461
      %v1589 = vpop.xlane.xlu0 %1588
      %1590 = vadd.xlane.f32.xlu0 %v1463
      %v1591 = vpop.xlane.xlu0 %1590
      %1592 = vadd.xlane.f32.xlu0 %v1465
      %v1593 = vpop.xlane.xlu0 %1592
      %1594 = vadd.xlane.f32.xlu0 %v1467
      %v1595 = vpop.xlane.xlu0 %1594
      %1596 = vadd.xlane.f32.xlu0 %v1469
      %v1597 = vpop.xlane.xlu0 %1596
      %1598 = vadd.xlane.f32.xlu0 %v1471
      %v1599 = vpop.xlane.xlu0 %1598
      %1600 = vadd.xlane.f32.xlu0 %v1473
      %v1601 = vpop.xlane.xlu0 %1600
      %1602 = vadd.xlane.f32.xlu0 %v1475
      %v1603 = vpop.xlane.xlu0 %1602
      %1604 = vadd.xlane.f32.xlu0 %v1477
      %v1605 = vpop.xlane.xlu0 %1604
      %1606 = vadd.xlane.f32.xlu0 %v1479
      %v1607 = vpop.xlane.xlu0 %1606
      %1608 = vadd.xlane.f32.xlu0 %v1481
      %v1609 = vpop.xlane.xlu0 %1608
      %1610 = vadd.xlane.f32.xlu0 %v1483
      %v1611 = vpop.xlane.xlu0 %1610
      %1612 = vadd.xlane.f32.xlu0 %v1485
      %v1613 = vpop.xlane.xlu0 %1612
      %1614 = vadd.xlane.f32.xlu0 %v1487
      %v1615 = vpop.xlane.xlu0 %1614
      %1616 = vadd.xlane.f32.xlu0 %v1489
      %v1617 = vpop.xlane.xlu0 %1616
      %v1618 = vadd.f32 %v1522, %v1555
      %v1619 = vadd.f32 %v1523, %v1557
      %v1620 = vadd.f32 %v1524, %v1559
      %v1621 = vadd.f32 %v1525, %v1561
      %v1622 = vadd.f32 %v1526, %v1563
      %v1623 = vadd.f32 %v1527, %v1565
      %v1624 = vadd.f32 %v1528, %v1567
      %v1625 = vadd.f32 %v1529, %v1569
      %v1626 = vadd.f32 %v1530, %v1571
      %v1627 = vadd.f32 %v1531, %v1573
      %v1628 = vadd.f32 %v1532, %v1575
      %v1629 = vadd.f32 %v1533, %v1577
      %v1630 = vadd.f32 %v1534, %v1579
      %v1631 = vadd.f32 %v1535, %v1581
      %v1632 = vadd.f32 %v1536, %v1583
      %v1633 = vadd.f32 %v1537, %v1585
      %v1634 = vadd.f32 %v1538, %v1587
      %v1635 = vadd.f32 %v1539, %v1589
      %v1636 = vadd.f32 %v1540, %v1591
      %v1637 = vadd.f32 %v1541, %v1593
      %v1638 = vadd.f32 %v1542, %v1595
      %v1639 = vadd.f32 %v1543, %v1597
      %v1640 = vadd.f32 %v1544, %v1599
      %v1641 = vadd.f32 %v1545, %v1601
      %v1642 = vadd.f32 %v1546, %v1603
      %v1643 = vadd.f32 %v1547, %v1605
      %v1644 = vadd.f32 %v1548, %v1607
      %v1645 = vadd.f32 %v1549, %v1609
      %v1646 = vadd.f32 %v1550, %v1611
      %v1647 = vadd.f32 %v1551, %v1613
      %v1648 = vadd.f32 %v1552, %v1615
      %v1649 = vadd.f32 %v1553, %v1617
      %vm1650 = vcmask 7168
      %1651 = vst.msk [vmem:[#allocation3] sm:$0xff] %vm1650, %v1618
      %1652 = vst.msk [vmem:[#allocation3 + $0x8] sm:$0xff] %vm1650, %v1619
      %1653 = vst.msk [vmem:[#allocation3 + $0x10] sm:$0xff] %vm1650, %v1620
      %1654 = vst.msk [vmem:[#allocation3 + $0x18] sm:$0xff] %vm1650, %v1621
      %1655 = vst.msk [vmem:[#allocation3 + $0x20] sm:$0xff] %vm1650, %v1622
      %1656 = vst.msk [vmem:[#allocation3 + $0x28] sm:$0xff] %vm1650, %v1623
      %1657 = vst.msk [vmem:[#allocation3 + $0x30] sm:$0xff] %vm1650, %v1624
      %1658 = vst.msk [vmem:[#allocation3 + $0x38] sm:$0xff] %vm1650, %v1625
      %1659 = vst.msk [vmem:[#allocation3 + $0x40] sm:$0xff] %vm1650, %v1626
      %1660 = vst.msk [vmem:[#allocation3 + $0x48] sm:$0xff] %vm1650, %v1627
      %1661 = vst.msk [vmem:[#allocation3 + $0x50] sm:$0xff] %vm1650, %v1628
      %1662 = vst.msk [vmem:[#allocation3 + $0x58] sm:$0xff] %vm1650, %v1629
      %1663 = vst.msk [vmem:[#allocation3 + $0x60] sm:$0xff] %vm1650, %v1630
      %1664 = vst.msk [vmem:[#allocation3 + $0x68] sm:$0xff] %vm1650, %v1631
      %1665 = vst.msk [vmem:[#allocation3 + $0x70] sm:$0xff] %vm1650, %v1632
      %1666 = vst.msk [vmem:[#allocation3 + $0x78] sm:$0xff] %vm1650, %v1633
      %1667 = vst.msk [vmem:[#allocation3 + $0x80] sm:$0xff] %vm1650, %v1634
      %1668 = vst.msk [vmem:[#allocation3 + $0x88] sm:$0xff] %vm1650, %v1635
      %1669 = vst.msk [vmem:[#allocation3 + $0x90] sm:$0xff] %vm1650, %v1636
      %1670 = vst.msk [vmem:[#allocation3 + $0x98] sm:$0xff] %vm1650, %v1637
      %1671 = vst.msk [vmem:[#allocation3 + $0xa0] sm:$0xff] %vm1650, %v1638
      %1672 = vst.msk [vmem:[#allocation3 + $0xa8] sm:$0xff] %vm1650, %v1639
      %1673 = vst.msk [vmem:[#allocation3 + $0xb0] sm:$0xff] %vm1650, %v1640
      %1674 = vst.msk [vmem:[#allocation3 + $0xb8] sm:$0xff] %vm1650, %v1641
      %1675 = vst.msk [vmem:[#allocation3 + $0xc0] sm:$0xff] %vm1650, %v1642
      %1676 = vst.msk [vmem:[#allocation3 + $0xc8] sm:$0xff] %vm1650, %v1643
      %1677 = vst.msk [vmem:[#allocation3 + $0xd0] sm:$0xff] %vm1650, %v1644
      %1678 = vst.msk [vmem:[#allocation3 + $0xd8] sm:$0xff] %vm1650, %v1645
      %1679 = vst.msk [vmem:[#allocation3 + $0xe0] sm:$0xff] %vm1650, %v1646
      %1680 = vst.msk [vmem:[#allocation3 + $0xe8] sm:$0xff] %vm1650, %v1647
      %1681 = vst.msk [vmem:[#allocation3 + $0xf0] sm:$0xff] %vm1650, %v1648
      %1682 = vst.msk [vmem:[#allocation3 + $0xf8] sm:$0xff] %vm1650, %v1649
      %v1683 = vld [vmem:[%s277] sm:$0xff]
      %v1684 = vld [vmem:[%s277 + $0x8] sm:$0xff]
      %v1685 = vld [vmem:[%s277 + $0x10] sm:$0xff]
      %v1686 = vld [vmem:[%s277 + $0x18] sm:$0xff]
      %v1687 = vld [vmem:[%s277 + $0x20] sm:$0xff]
      %v1688 = vld [vmem:[%s277 + $0x28] sm:$0xff]
      %v1689 = vld [vmem:[%s277 + $0x30] sm:$0xff]
      %v1690 = vld [vmem:[%s277 + $0x38] sm:$0xff]
      %v1691 = vld [vmem:[%s277 + $0x40] sm:$0xff]
      %v1692 = vld [vmem:[%s277 + $0x48] sm:$0xff]
      %v1693 = vld [vmem:[%s277 + $0x50] sm:$0xff]
      %v1694 = vld [vmem:[%s277 + $0x58] sm:$0xff]
      %v1695 = vld [vmem:[%s277 + $0x60] sm:$0xff]
      %v1696 = vld [vmem:[%s277 + $0x68] sm:$0xff]
      %v1697 = vld [vmem:[%s277 + $0x70] sm:$0xff]
      %v1698 = vld [vmem:[%s277 + $0x78] sm:$0xff]
      %v1699 = vld [vmem:[%s277 + $0x80] sm:$0xff]
      %v1700 = vld [vmem:[%s277 + $0x88] sm:$0xff]
      %v1701 = vld [vmem:[%s277 + $0x90] sm:$0xff]
      %v1702 = vld [vmem:[%s277 + $0x98] sm:$0xff]
      %v1703 = vld [vmem:[%s277 + $0xa0] sm:$0xff]
      %v1704 = vld [vmem:[%s277 + $0xa8] sm:$0xff]
      %v1705 = vld [vmem:[%s277 + $0xb0] sm:$0xff]
      %v1706 = vld [vmem:[%s277 + $0xb8] sm:$0xff]
      %v1707 = vld [vmem:[%s277 + $0xc0] sm:$0xff]
      %v1708 = vld [vmem:[%s277 + $0xc8] sm:$0xff]
      %v1709 = vld [vmem:[%s277 + $0xd0] sm:$0xff]
      %v1710 = vld [vmem:[%s277 + $0xd8] sm:$0xff]
      %v1711 = vld [vmem:[%s277 + $0xe0] sm:$0xff]
      %v1712 = vld [vmem:[%s277 + $0xe8] sm:$0xff]
      %v1713 = vld [vmem:[%s277 + $0xf0] sm:$0xff]
      %v1714 = vld [vmem:[%s277 + $0xf8] sm:$0xff]
      %1715 = vmatprep.subr.mxu0 0.0
      %1716 = vmatpush1.msra.mxu0 %v1698
      %1717 = vmatprep.subr.mxu0 0.0
      %1718 = vmatpush1.msra.mxu0 %v1697
      %1719 = vmatprep.subr.mxu0 0.0
      %1720 = vmatpush1.msra.mxu0 %v1696
      %1721 = vmatprep.subr.mxu0 0.0
      %1722 = vmatpush1.msra.mxu0 %v1695
      %1723 = vmatprep.subr.mxu0 0.0
      %1724 = vmatpush1.msra.mxu0 %v1694
      %1725 = vmatprep.subr.mxu0 0.0
      %1726 = vmatpush1.msra.mxu0 %v1693
      %1727 = vmatprep.subr.mxu0 0.0
      %1728 = vmatpush1.msra.mxu0 %v1692
      %1729 = vmatprep.subr.mxu0 0.0
      %1730 = vmatpush1.msra.mxu0 %v1691
      %1731 = vmatprep.subr.mxu0 0.0
      %1732 = vmatpush1.msra.mxu0 %v1690
      %1733 = vmatprep.subr.mxu0 0.0
      %1734 = vmatpush1.msra.mxu0 %v1689
      %1735 = vmatprep.subr.mxu0 0.0
      %1736 = vmatpush1.msra.mxu0 %v1688
      %1737 = vmatprep.subr.mxu0 0.0
      %1738 = vmatpush1.msra.mxu0 %v1687
      %1739 = vmatprep.subr.mxu0 0.0
      %1740 = vmatpush1.msra.mxu0 %v1686
      %1741 = vmatprep.subr.mxu0 0.0
      %1742 = vmatpush1.msra.mxu0 %v1685
      %1743 = vmatprep.subr.mxu0 0.0
      %1744 = vmatpush1.msra.mxu0 %v1684
      %1745 = vmatprep.subr.mxu0 0.0
      %1746 = vmatpush1.msra.mxu0 %v1683
      %1747 = vmatprep.subr.mxu0 0.0
      %1748 = vmatpush2.msra.mxu0 0.0
      %1749 = vmatprep.subr.mxu0 0.0
      %1750 = vmatpush2.msra.mxu0 0.0
      %1751 = vmatprep.subr.mxu0 0.0
      %1752 = vmatpush2.msra.mxu0 0.0
      %1753 = vmatprep.subr.mxu0 0.0
      %1754 = vmatpush2.msra.mxu0 0.0
      %1755 = vmatprep.subr.mxu0 0.0
      %1756 = vmatpush2.msra.mxu0 0.0
      %1757 = vmatprep.subr.mxu0 0.0
      %1758 = vmatpush2.msra.mxu0 0.0
      %1759 = vmatprep.subr.mxu0 0.0
      %1760 = vmatpush2.msra.mxu0 0.0
      %1761 = vmatprep.subr.mxu0 0.0
      %1762 = vmatpush2.msra.mxu0 0.0
      %1763 = vmatprep.subr.mxu0 0.0
      %1764 = vmatpush2.msra.mxu0 0.0
      %1765 = vmatprep.subr.mxu0 0.0
      %1766 = vmatpush2.msra.mxu0 0.0
      %1767 = vmatprep.subr.mxu0 0.0
      %1768 = vmatpush2.msra.mxu0 0.0
      %1769 = vmatprep.subr.mxu0 0.0
      %1770 = vmatpush2.msra.mxu0 0.0
      %1771 = vmatprep.subr.mxu0 0.0
      %1772 = vmatpush2.msra.mxu0 0.0
      %1773 = vmatprep.subr.mxu0 0.0
      %1774 = vmatpush2.msra.mxu0 0.0
      %1775 = vmatprep.subr.mxu0 0.0
      %1776 = vmatpush2.msra.mxu0 0.0
      %1777 = vmatprep.subr.mxu0 0.0
      %1778 = vmatpush2.msra.mxu0 0.0
      %1779 = vmatprep.mubr.f32.mxu0 0.0
      %1780 = vmatmul.mubr.f32.gmra.mxu0 %v1427
      %v1781 = vpop.f32.mrf.mxu0
      %v1782 = vadd.f32 0.0, %v1781
      %v1783 = vpop.f32.mrf.mxu0
      %1784 = vmatprep.mubr.f32.mxu0 0.0
      %1785 = vmatmul.mubr.f32.gmra.mxu0 %v1429
      %v1786 = vpop.f32.mrf.mxu0
      %v1787 = vadd.f32 0.0, %v1786
      %v1788 = vpop.f32.mrf.mxu0
      %1789 = vmatprep.mubr.f32.mxu0 0.0
      %1790 = vmatmul.mubr.f32.gmra.mxu0 %v1431
      %v1791 = vpop.f32.mrf.mxu0
      %v1792 = vadd.f32 0.0, %v1791
      %v1793 = vpop.f32.mrf.mxu0
      %1794 = vmatprep.mubr.f32.mxu0 0.0
      %1795 = vmatmul.mubr.f32.gmra.mxu0 %v1433
      %v1796 = vpop.f32.mrf.mxu0
      %v1797 = vadd.f32 0.0, %v1796
      %v1798 = vpop.f32.mrf.mxu0
      %1799 = vmatprep.mubr.f32.mxu0 0.0
      %1800 = vmatmul.mubr.f32.gmra.mxu0 %v1435
      %v1801 = vpop.f32.mrf.mxu0
      %v1802 = vadd.f32 0.0, %v1801
      %v1803 = vpop.f32.mrf.mxu0
      %1804 = vmatprep.mubr.f32.mxu0 0.0
      %1805 = vmatmul.mubr.f32.gmra.mxu0 %v1437
      %v1806 = vpop.f32.mrf.mxu0
      %v1807 = vadd.f32 0.0, %v1806
      %v1808 = vpop.f32.mrf.mxu0
      %1809 = vmatprep.mubr.f32.mxu0 0.0
      %1810 = vmatmul.mubr.f32.gmra.mxu0 %v1439
      %v1811 = vpop.f32.mrf.mxu0
      %v1812 = vadd.f32 0.0, %v1811
      %v1813 = vpop.f32.mrf.mxu0
      %1814 = vmatprep.mubr.f32.mxu0 0.0
      %1815 = vmatmul.mubr.f32.gmra.mxu0 %v1441
      %v1816 = vpop.f32.mrf.mxu0
      %v1817 = vadd.f32 0.0, %v1816
      %v1818 = vpop.f32.mrf.mxu0
      %1819 = vmatprep.mubr.f32.mxu0 0.0
      %1820 = vmatmul.mubr.f32.gmra.mxu0 %v1443
      %v1821 = vpop.f32.mrf.mxu0
      %v1822 = vadd.f32 0.0, %v1821
      %v1823 = vpop.f32.mrf.mxu0
      %1824 = vmatprep.mubr.f32.mxu0 0.0
      %1825 = vmatmul.mubr.f32.gmra.mxu0 %v1445
      %v1826 = vpop.f32.mrf.mxu0
      %v1827 = vadd.f32 0.0, %v1826
      %v1828 = vpop.f32.mrf.mxu0
      %1829 = vmatprep.mubr.f32.mxu0 0.0
      %1830 = vmatmul.mubr.f32.gmra.mxu0 %v1447
      %v1831 = vpop.f32.mrf.mxu0
      %v1832 = vadd.f32 0.0, %v1831
      %v1833 = vpop.f32.mrf.mxu0
      %1834 = vmatprep.mubr.f32.mxu0 0.0
      %1835 = vmatmul.mubr.f32.gmra.mxu0 %v1449
      %v1836 = vpop.f32.mrf.mxu0
      %v1837 = vadd.f32 0.0, %v1836
      %v1838 = vpop.f32.mrf.mxu0
      %1839 = vmatprep.mubr.f32.mxu0 0.0
      %1840 = vmatmul.mubr.f32.gmra.mxu0 %v1451
      %v1841 = vpop.f32.mrf.mxu0
      %v1842 = vadd.f32 0.0, %v1841
      %v1843 = vpop.f32.mrf.mxu0
      %1844 = vmatprep.mubr.f32.mxu0 0.0
      %1845 = vmatmul.mubr.f32.gmra.mxu0 %v1453
      %v1846 = vpop.f32.mrf.mxu0
      %v1847 = vadd.f32 0.0, %v1846
      %v1848 = vpop.f32.mrf.mxu0
      %1849 = vmatprep.mubr.f32.mxu0 0.0
      %1850 = vmatmul.mubr.f32.gmra.mxu0 %v1455
      %v1851 = vpop.f32.mrf.mxu0
      %v1852 = vadd.f32 0.0, %v1851
      %v1853 = vpop.f32.mrf.mxu0
      %1854 = vmatprep.mubr.f32.mxu0 0.0
      %1855 = vmatmul.mubr.f32.gmra.mxu0 %v1457
      %v1856 = vpop.f32.mrf.mxu0
      %v1857 = vadd.f32 0.0, %v1856
      %v1858 = vpop.f32.mrf.mxu0
      %1859 = vdwg.mxu0
      %1860 = vmatprep.subr.mxu0 0.0
      %1861 = vmatpush1.msra.mxu0 %v1714
      %1862 = vmatprep.subr.mxu0 0.0
      %1863 = vmatpush1.msra.mxu0 %v1713
      %1864 = vmatprep.subr.mxu0 0.0
      %1865 = vmatpush1.msra.mxu0 %v1712
      %1866 = vmatprep.subr.mxu0 0.0
      %1867 = vmatpush1.msra.mxu0 %v1711
      %1868 = vmatprep.subr.mxu0 0.0
      %1869 = vmatpush1.msra.mxu0 %v1710
      %1870 = vmatprep.subr.mxu0 0.0
      %1871 = vmatpush1.msra.mxu0 %v1709
      %1872 = vmatprep.subr.mxu0 0.0
      %1873 = vmatpush1.msra.mxu0 %v1708
      %1874 = vmatprep.subr.mxu0 0.0
      %1875 = vmatpush1.msra.mxu0 %v1707
      %1876 = vmatprep.subr.mxu0 0.0
      %1877 = vmatpush1.msra.mxu0 %v1706
      %1878 = vmatprep.subr.mxu0 0.0
      %1879 = vmatpush1.msra.mxu0 %v1705
      %1880 = vmatprep.subr.mxu0 0.0
      %1881 = vmatpush1.msra.mxu0 %v1704
      %1882 = vmatprep.subr.mxu0 0.0
      %1883 = vmatpush1.msra.mxu0 %v1703
      %1884 = vmatprep.subr.mxu0 0.0
      %1885 = vmatpush1.msra.mxu0 %v1702
      %1886 = vmatprep.subr.mxu0 0.0
      %1887 = vmatpush1.msra.mxu0 %v1701
      %1888 = vmatprep.subr.mxu0 0.0
      %1889 = vmatpush1.msra.mxu0 %v1700
      %1890 = vmatprep.subr.mxu0 0.0
      %1891 = vmatpush1.msra.mxu0 %v1699
      %1892 = vmatprep.subr.mxu0 0.0
      %1893 = vmatpush2.msra.mxu0 0.0
      %1894 = vmatprep.subr.mxu0 0.0
      %1895 = vmatpush2.msra.mxu0 0.0
      %1896 = vmatprep.subr.mxu0 0.0
      %1897 = vmatpush2.msra.mxu0 0.0
      %1898 = vmatprep.subr.mxu0 0.0
      %1899 = vmatpush2.msra.mxu0 0.0
      %1900 = vmatprep.subr.mxu0 0.0
      %1901 = vmatpush2.msra.mxu0 0.0
      %1902 = vmatprep.subr.mxu0 0.0
      %1903 = vmatpush2.msra.mxu0 0.0
      %1904 = vmatprep.subr.mxu0 0.0
      %1905 = vmatpush2.msra.mxu0 0.0
      %1906 = vmatprep.subr.mxu0 0.0
      %1907 = vmatpush2.msra.mxu0 0.0
      %1908 = vmatprep.subr.mxu0 0.0
      %1909 = vmatpush2.msra.mxu0 0.0
      %1910 = vmatprep.subr.mxu0 0.0
      %1911 = vmatpush2.msra.mxu0 0.0
      %1912 = vmatprep.subr.mxu0 0.0
      %1913 = vmatpush2.msra.mxu0 0.0
      %1914 = vmatprep.subr.mxu0 0.0
      %1915 = vmatpush2.msra.mxu0 0.0
      %1916 = vmatprep.subr.mxu0 0.0
      %1917 = vmatpush2.msra.mxu0 0.0
      %1918 = vmatprep.subr.mxu0 0.0
      %1919 = vmatpush2.msra.mxu0 0.0
      %1920 = vmatprep.subr.mxu0 0.0
      %1921 = vmatpush2.msra.mxu0 0.0
      %1922 = vmatprep.subr.mxu0 0.0
      %1923 = vmatpush2.msra.mxu0 0.0
      %1924 = vmatprep.mubr.f32.mxu0 0.0
      %1925 = vmatmul.mubr.f32.gmra.mxu0 %v1459
      %v1926 = vpop.f32.mrf.mxu0
      %v1927 = vadd.f32 0.0, %v1926
      %v1928 = vpop.f32.mrf.mxu0
      %1929 = vmatprep.mubr.f32.mxu0 0.0
      %1930 = vmatmul.mubr.f32.gmra.mxu0 %v1461
      %v1931 = vpop.f32.mrf.mxu0
      %v1932 = vadd.f32 0.0, %v1931
      %v1933 = vpop.f32.mrf.mxu0
      %1934 = vmatprep.mubr.f32.mxu0 0.0
      %1935 = vmatmul.mubr.f32.gmra.mxu0 %v1463
      %v1936 = vpop.f32.mrf.mxu0
      %v1937 = vadd.f32 0.0, %v1936
      %v1938 = vpop.f32.mrf.mxu0
      %1939 = vmatprep.mubr.f32.mxu0 0.0
      %1940 = vmatmul.mubr.f32.gmra.mxu0 %v1465
      %v1941 = vpop.f32.mrf.mxu0
      %v1942 = vadd.f32 0.0, %v1941
      %v1943 = vpop.f32.mrf.mxu0
      %1944 = vmatprep.mubr.f32.mxu0 0.0
      %1945 = vmatmul.mubr.f32.gmra.mxu0 %v1467
      %v1946 = vpop.f32.mrf.mxu0
      %v1947 = vadd.f32 0.0, %v1946
      %v1948 = vpop.f32.mrf.mxu0
      %1949 = vmatprep.mubr.f32.mxu0 0.0
      %1950 = vmatmul.mubr.f32.gmra.mxu0 %v1469
      %v1951 = vpop.f32.mrf.mxu0
      %v1952 = vadd.f32 0.0, %v1951
      %v1953 = vpop.f32.mrf.mxu0
      %1954 = vmatprep.mubr.f32.mxu0 0.0
      %1955 = vmatmul.mubr.f32.gmra.mxu0 %v1471
      %v1956 = vpop.f32.mrf.mxu0
      %v1957 = vadd.f32 0.0, %v1956
      %v1958 = vpop.f32.mrf.mxu0
      %1959 = vmatprep.mubr.f32.mxu0 0.0
      %1960 = vmatmul.mubr.f32.gmra.mxu0 %v1473
      %v1961 = vpop.f32.mrf.mxu0
      %v1962 = vadd.f32 0.0, %v1961
      %v1963 = vpop.f32.mrf.mxu0
      %1964 = vmatprep.mubr.f32.mxu0 0.0
      %1965 = vmatmul.mubr.f32.gmra.mxu0 %v1475
      %v1966 = vpop.f32.mrf.mxu0
      %v1967 = vadd.f32 0.0, %v1966
      %v1968 = vpop.f32.mrf.mxu0
      %1969 = vmatprep.mubr.f32.mxu0 0.0
      %1970 = vmatmul.mubr.f32.gmra.mxu0 %v1477
      %v1971 = vpop.f32.mrf.mxu0
      %v1972 = vadd.f32 0.0, %v1971
      %v1973 = vpop.f32.mrf.mxu0
      %1974 = vmatprep.mubr.f32.mxu0 0.0
      %1975 = vmatmul.mubr.f32.gmra.mxu0 %v1479
      %v1976 = vpop.f32.mrf.mxu0
      %v1977 = vadd.f32 0.0, %v1976
      %v1978 = vpop.f32.mrf.mxu0
      %1979 = vmatprep.mubr.f32.mxu0 0.0
      %1980 = vmatmul.mubr.f32.gmra.mxu0 %v1481
      %v1981 = vpop.f32.mrf.mxu0
      %v1982 = vadd.f32 0.0, %v1981
      %v1983 = vpop.f32.mrf.mxu0
      %1984 = vmatprep.mubr.f32.mxu0 0.0
      %1985 = vmatmul.mubr.f32.gmra.mxu0 %v1483
      %v1986 = vpop.f32.mrf.mxu0
      %v1987 = vadd.f32 0.0, %v1986
      %v1988 = vpop.f32.mrf.mxu0
      %1989 = vmatprep.mubr.f32.mxu0 0.0
      %1990 = vmatmul.mubr.f32.gmra.mxu0 %v1485
      %v1991 = vpop.f32.mrf.mxu0
      %v1992 = vadd.f32 0.0, %v1991
      %v1993 = vpop.f32.mrf.mxu0
      %1994 = vmatprep.mubr.f32.mxu0 0.0
      %1995 = vmatmul.mubr.f32.gmra.mxu0 %v1487
      %v1996 = vpop.f32.mrf.mxu0
      %v1997 = vadd.f32 0.0, %v1996
      %v1998 = vpop.f32.mrf.mxu0
      %1999 = vmatprep.mubr.f32.mxu0 0.0
      %2000 = vmatmul.mubr.f32.gmra.mxu0 %v1489
      %v2001 = vpop.f32.mrf.mxu0
      %v2002 = vadd.f32 0.0, %v2001
      %v2003 = vpop.f32.mrf.mxu0
      %2004 = vdwg.mxu0
      %v2005 = vld [vmem:[#allocation4] sm:$0xff]
      %v2006 = vld [vmem:[#allocation4 + $0x8] sm:$0xff]
      %v2007 = vld [vmem:[#allocation4 + $0x10] sm:$0xff]
      %v2008 = vld [vmem:[#allocation4 + $0x18] sm:$0xff]
      %v2009 = vld [vmem:[#allocation4 + $0x20] sm:$0xff]
      %v2010 = vld [vmem:[#allocation4 + $0x28] sm:$0xff]
      %v2011 = vld [vmem:[#allocation4 + $0x30] sm:$0xff]
      %v2012 = vld [vmem:[#allocation4 + $0x38] sm:$0xff]
      %v2013 = vld [vmem:[#allocation4 + $0x40] sm:$0xff]
      %v2014 = vld [vmem:[#allocation4 + $0x48] sm:$0xff]
      %v2015 = vld [vmem:[#allocation4 + $0x50] sm:$0xff]
      %v2016 = vld [vmem:[#allocation4 + $0x58] sm:$0xff]
      %v2017 = vld [vmem:[#allocation4 + $0x60] sm:$0xff]
      %v2018 = vld [vmem:[#allocation4 + $0x68] sm:$0xff]
      %v2019 = vld [vmem:[#allocation4 + $0x70] sm:$0xff]
      %v2020 = vld [vmem:[#allocation4 + $0x78] sm:$0xff]
      %v2021 = vld [vmem:[#allocation4 + $0x80] sm:$0xff]
      %v2022 = vld [vmem:[#allocation4 + $0x88] sm:$0xff]
      %v2023 = vld [vmem:[#allocation4 + $0x90] sm:$0xff]
      %v2024 = vld [vmem:[#allocation4 + $0x98] sm:$0xff]
      %v2025 = vld [vmem:[#allocation4 + $0xa0] sm:$0xff]
      %v2026 = vld [vmem:[#allocation4 + $0xa8] sm:$0xff]
      %v2027 = vld [vmem:[#allocation4 + $0xb0] sm:$0xff]
      %v2028 = vld [vmem:[#allocation4 + $0xb8] sm:$0xff]
      %v2029 = vld [vmem:[#allocation4 + $0xc0] sm:$0xff]
      %v2030 = vld [vmem:[#allocation4 + $0xc8] sm:$0xff]
      %v2031 = vld [vmem:[#allocation4 + $0xd0] sm:$0xff]
      %v2032 = vld [vmem:[#allocation4 + $0xd8] sm:$0xff]
      %v2033 = vld [vmem:[#allocation4 + $0xe0] sm:$0xff]
      %v2034 = vld [vmem:[#allocation4 + $0xe8] sm:$0xff]
      %v2035 = vld [vmem:[#allocation4 + $0xf0] sm:$0xff]
      %v2036 = vld [vmem:[#allocation4 + $0xf8] sm:$0xff]
      %2038 = vset.pattern.permute.xlu0 0
      %2039 = vperm.xlu0 %2038, %v1171
      %v2040 = vpop.permute.xlu0 %2039
      %2043 = vset.pattern.permute.xlu0 0
      %2044 = vperm.xlu0 %2043, %v1173
      %v2045 = vpop.permute.xlu0 %2044
      %2048 = vset.pattern.permute.xlu0 0
      %2049 = vperm.xlu0 %2048, %v1175
      %v2050 = vpop.permute.xlu0 %2049
      %2053 = vset.pattern.permute.xlu0 0
      %2054 = vperm.xlu0 %2053, %v1177
      %v2055 = vpop.permute.xlu0 %2054
      %2058 = vset.pattern.permute.xlu0 0
      %2059 = vperm.xlu0 %2058, %v1179
      %v2060 = vpop.permute.xlu0 %2059
      %2063 = vset.pattern.permute.xlu0 0
      %2064 = vperm.xlu0 %2063, %v1181
      %v2065 = vpop.permute.xlu0 %2064
      %2068 = vset.pattern.permute.xlu0 0
      %2069 = vperm.xlu0 %2068, %v1183
      %v2070 = vpop.permute.xlu0 %2069
      %2073 = vset.pattern.permute.xlu0 0
      %2074 = vperm.xlu0 %2073, %v1185
      %v2075 = vpop.permute.xlu0 %2074
      %2078 = vset.pattern.permute.xlu0 0
      %2079 = vperm.xlu0 %2078, %v1187
      %v2080 = vpop.permute.xlu0 %2079
      %2083 = vset.pattern.permute.xlu0 0
      %2084 = vperm.xlu0 %2083, %v1189
      %v2085 = vpop.permute.xlu0 %2084
      %2088 = vset.pattern.permute.xlu0 0
      %2089 = vperm.xlu0 %2088, %v1191
      %v2090 = vpop.permute.xlu0 %2089
      %2093 = vset.pattern.permute.xlu0 0
      %2094 = vperm.xlu0 %2093, %v1193
      %v2095 = vpop.permute.xlu0 %2094
      %2098 = vset.pattern.permute.xlu0 0
      %2099 = vperm.xlu0 %2098, %v1195
      %v2100 = vpop.permute.xlu0 %2099
      %2103 = vset.pattern.permute.xlu0 0
      %2104 = vperm.xlu0 %2103, %v1197
      %v2105 = vpop.permute.xlu0 %2104
      %2108 = vset.pattern.permute.xlu0 0
      %2109 = vperm.xlu0 %2108, %v1199
      %v2110 = vpop.permute.xlu0 %2109
      %2113 = vset.pattern.permute.xlu0 0
      %2114 = vperm.xlu0 %2113, %v1201
      %v2115 = vpop.permute.xlu0 %2114
      %2118 = vset.pattern.permute.xlu0 0
      %2119 = vperm.xlu0 %2118, %v1203
      %v2120 = vpop.permute.xlu0 %2119
      %2123 = vset.pattern.permute.xlu0 0
      %2124 = vperm.xlu0 %2123, %v1205
      %v2125 = vpop.permute.xlu0 %2124
      %2128 = vset.pattern.permute.xlu0 0
      %2129 = vperm.xlu0 %2128, %v1207
      %v2130 = vpop.permute.xlu0 %2129
      %2133 = vset.pattern.permute.xlu0 0
      %2134 = vperm.xlu0 %2133, %v1209
      %v2135 = vpop.permute.xlu0 %2134
      %2138 = vset.pattern.permute.xlu0 0
      %2139 = vperm.xlu0 %2138, %v1211
      %v2140 = vpop.permute.xlu0 %2139
      %2143 = vset.pattern.permute.xlu0 0
      %2144 = vperm.xlu0 %2143, %v1213
      %v2145 = vpop.permute.xlu0 %2144
      %2148 = vset.pattern.permute.xlu0 0
      %2149 = vperm.xlu0 %2148, %v1215
      %v2150 = vpop.permute.xlu0 %2149
      %2153 = vset.pattern.permute.xlu0 0
      %2154 = vperm.xlu0 %2153, %v1217
      %v2155 = vpop.permute.xlu0 %2154
      %2158 = vset.pattern.permute.xlu0 0
      %2159 = vperm.xlu0 %2158, %v1219
      %v2160 = vpop.permute.xlu0 %2159
      %2163 = vset.pattern.permute.xlu0 0
      %2164 = vperm.xlu0 %2163, %v1221
      %v2165 = vpop.permute.xlu0 %2164
      %2168 = vset.pattern.permute.xlu0 0
      %2169 = vperm.xlu0 %2168, %v1223
      %v2170 = vpop.permute.xlu0 %2169
      %2173 = vset.pattern.permute.xlu0 0
      %2174 = vperm.xlu0 %2173, %v1225
      %v2175 = vpop.permute.xlu0 %2174
      %2178 = vset.pattern.permute.xlu0 0
      %2179 = vperm.xlu0 %2178, %v1227
      %v2180 = vpop.permute.xlu0 %2179
      %2183 = vset.pattern.permute.xlu0 0
      %2184 = vperm.xlu0 %2183, %v1229
      %v2185 = vpop.permute.xlu0 %2184
      %2188 = vset.pattern.permute.xlu0 0
      %2189 = vperm.xlu0 %2188, %v1231
      %v2190 = vpop.permute.xlu0 %2189
      %2193 = vset.pattern.permute.xlu0 0
      %2194 = vperm.xlu0 %2193, %v1233
      %v2195 = vpop.permute.xlu0 %2194
      %v2197 = vmul.f32 %v2040, %v2005
      %v2198 = vmul.f32 %v2045, %v2006
      %v2199 = vmul.f32 %v2050, %v2007
      %v2200 = vmul.f32 %v2055, %v2008
      %v2201 = vmul.f32 %v2060, %v2009
      %v2202 = vmul.f32 %v2065, %v2010
      %v2203 = vmul.f32 %v2070, %v2011
      %v2204 = vmul.f32 %v2075, %v2012
      %v2205 = vmul.f32 %v2080, %v2013
      %v2206 = vmul.f32 %v2085, %v2014
      %v2207 = vmul.f32 %v2090, %v2015
      %v2208 = vmul.f32 %v2095, %v2016
      %v2209 = vmul.f32 %v2100, %v2017
      %v2210 = vmul.f32 %v2105, %v2018
      %v2211 = vmul.f32 %v2110, %v2019
      %v2212 = vmul.f32 %v2115, %v2020
      %v2213 = vmul.f32 %v2120, %v2021
      %v2214 = vmul.f32 %v2125, %v2022
      %v2215 = vmul.f32 %v2130, %v2023
      %v2216 = vmul.f32 %v2135, %v2024
      %v2217 = vmul.f32 %v2140, %v2025
      %v2218 = vmul.f32 %v2145, %v2026
      %v2219 = vmul.f32 %v2150, %v2027
      %v2220 = vmul.f32 %v2155, %v2028
      %v2221 = vmul.f32 %v2160, %v2029
      %v2222 = vmul.f32 %v2165, %v2030
      %v2223 = vmul.f32 %v2170, %v2031
      %v2224 = vmul.f32 %v2175, %v2032
      %v2225 = vmul.f32 %v2180, %v2033
      %v2226 = vmul.f32 %v2185, %v2034
      %v2227 = vmul.f32 %v2190, %v2035
      %v2228 = vmul.f32 %v2195, %v2036
      %v2229 = vadd.f32 %v2197, %v1782
      %v2230 = vadd.f32 %v2198, %v1787
      %v2231 = vadd.f32 %v2199, %v1792
      %v2232 = vadd.f32 %v2200, %v1797
      %v2233 = vadd.f32 %v2201, %v1802
      %v2234 = vadd.f32 %v2202, %v1807
      %v2235 = vadd.f32 %v2203, %v1812
      %v2236 = vadd.f32 %v2204, %v1817
      %v2237 = vadd.f32 %v2205, %v1822
      %v2238 = vadd.f32 %v2206, %v1827
      %v2239 = vadd.f32 %v2207, %v1832
      %v2240 = vadd.f32 %v2208, %v1837
      %v2241 = vadd.f32 %v2209, %v1842
      %v2242 = vadd.f32 %v2210, %v1847
      %v2243 = vadd.f32 %v2211, %v1852
      %v2244 = vadd.f32 %v2212, %v1857
      %v2245 = vadd.f32 %v2213, %v1927
      %v2246 = vadd.f32 %v2214, %v1932
      %v2247 = vadd.f32 %v2215, %v1937
      %v2248 = vadd.f32 %v2216, %v1942
      %v2249 = vadd.f32 %v2217, %v1947
      %v2250 = vadd.f32 %v2218, %v1952
      %v2251 = vadd.f32 %v2219, %v1957
      %v2252 = vadd.f32 %v2220, %v1962
      %v2253 = vadd.f32 %v2221, %v1967
      %v2254 = vadd.f32 %v2222, %v1972
      %v2255 = vadd.f32 %v2223, %v1977
      %v2256 = vadd.f32 %v2224, %v1982
      %v2257 = vadd.f32 %v2225, %v1987
      %v2258 = vadd.f32 %v2226, %v1992
      %v2259 = vadd.f32 %v2227, %v1997
      %v2260 = vadd.f32 %v2228, %v2002
      %2261 = vst.msk [vmem:[#allocation4] sm:$0xff] %vm487, %v2229
      %2262 = vst.msk [vmem:[#allocation4 + $0x8] sm:$0xff] %vm487, %v2230
      %2263 = vst.msk [vmem:[#allocation4 + $0x10] sm:$0xff] %vm487, %v2231
      %2264 = vst.msk [vmem:[#allocation4 + $0x18] sm:$0xff] %vm487, %v2232
      %2265 = vst.msk [vmem:[#allocation4 + $0x20] sm:$0xff] %vm487, %v2233
      %2266 = vst.msk [vmem:[#allocation4 + $0x28] sm:$0xff] %vm487, %v2234
      %2267 = vst.msk [vmem:[#allocation4 + $0x30] sm:$0xff] %vm487, %v2235
      %2268 = vst.msk [vmem:[#allocation4 + $0x38] sm:$0xff] %vm487, %v2236
      %2269 = vst.msk [vmem:[#allocation4 + $0x40] sm:$0xff] %vm487, %v2237
      %2270 = vst.msk [vmem:[#allocation4 + $0x48] sm:$0xff] %vm487, %v2238
      %2271 = vst.msk [vmem:[#allocation4 + $0x50] sm:$0xff] %vm487, %v2239
      %2272 = vst.msk [vmem:[#allocation4 + $0x58] sm:$0xff] %vm487, %v2240
      %2273 = vst.msk [vmem:[#allocation4 + $0x60] sm:$0xff] %vm487, %v2241
      %2274 = vst.msk [vmem:[#allocation4 + $0x68] sm:$0xff] %vm487, %v2242
      %2275 = vst.msk [vmem:[#allocation4 + $0x70] sm:$0xff] %vm487, %v2243
      %2276 = vst.msk [vmem:[#allocation4 + $0x78] sm:$0xff] %vm487, %v2244
      %2277 = vst.msk [vmem:[#allocation4 + $0x80] sm:$0xff] %vm487, %v2245
      %2278 = vst.msk [vmem:[#allocation4 + $0x88] sm:$0xff] %vm487, %v2246
      %2279 = vst.msk [vmem:[#allocation4 + $0x90] sm:$0xff] %vm487, %v2247
      %2280 = vst.msk [vmem:[#allocation4 + $0x98] sm:$0xff] %vm487, %v2248
      %2281 = vst.msk [vmem:[#allocation4 + $0xa0] sm:$0xff] %vm487, %v2249
      %2282 = vst.msk [vmem:[#allocation4 + $0xa8] sm:$0xff] %vm487, %v2250
      %2283 = vst.msk [vmem:[#allocation4 + $0xb0] sm:$0xff] %vm487, %v2251
      %2284 = vst.msk [vmem:[#allocation4 + $0xb8] sm:$0xff] %vm487, %v2252
      %2285 = vst.msk [vmem:[#allocation4 + $0xc0] sm:$0xff] %vm487, %v2253
      %2286 = vst.msk [vmem:[#allocation4 + $0xc8] sm:$0xff] %vm487, %v2254
      %2287 = vst.msk [vmem:[#allocation4 + $0xd0] sm:$0xff] %vm487, %v2255
      %2288 = vst.msk [vmem:[#allocation4 + $0xd8] sm:$0xff] %vm487, %v2256
      %2289 = vst.msk [vmem:[#allocation4 + $0xe0] sm:$0xff] %vm487, %v2257
      %2290 = vst.msk [vmem:[#allocation4 + $0xe8] sm:$0xff] %vm487, %v2258
      %2291 = vst.msk [vmem:[#allocation4 + $0xf0] sm:$0xff] %vm487, %v2259
      %2292 = vst.msk [vmem:[#allocation4 + $0xf8] sm:$0xff] %vm487, %v2260
      %2293 = vst.msk [vmem:[#allocation2] sm:$0xff] %vm1650, %v1106
      %2294 = vst.msk [vmem:[#allocation2 + $0x8] sm:$0xff] %vm1650, %v1107
      %2295 = vst.msk [vmem:[#allocation2 + $0x10] sm:$0xff] %vm1650, %v1108
      %2296 = vst.msk [vmem:[#allocation2 + $0x18] sm:$0xff] %vm1650, %v1109
      %2297 = vst.msk [vmem:[#allocation2 + $0x20] sm:$0xff] %vm1650, %v1110
      %2298 = vst.msk [vmem:[#allocation2 + $0x28] sm:$0xff] %vm1650, %v1111
      %2299 = vst.msk [vmem:[#allocation2 + $0x30] sm:$0xff] %vm1650, %v1112
      %2300 = vst.msk [vmem:[#allocation2 + $0x38] sm:$0xff] %vm1650, %v1113
      %2301 = vst.msk [vmem:[#allocation2 + $0x40] sm:$0xff] %vm1650, %v1114
      %2302 = vst.msk [vmem:[#allocation2 + $0x48] sm:$0xff] %vm1650, %v1115
      %2303 = vst.msk [vmem:[#allocation2 + $0x50] sm:$0xff] %vm1650, %v1116
      %2304 = vst.msk [vmem:[#allocation2 + $0x58] sm:$0xff] %vm1650, %v1117
      %2305 = vst.msk [vmem:[#allocation2 + $0x60] sm:$0xff] %vm1650, %v1118
      %2306 = vst.msk [vmem:[#allocation2 + $0x68] sm:$0xff] %vm1650, %v1119
      %2307 = vst.msk [vmem:[#allocation2 + $0x70] sm:$0xff] %vm1650, %v1120
      %2308 = vst.msk [vmem:[#allocation2 + $0x78] sm:$0xff] %vm1650, %v1121
      %2309 = vst.msk [vmem:[#allocation2 + $0x80] sm:$0xff] %vm1650, %v1122
      %2310 = vst.msk [vmem:[#allocation2 + $0x88] sm:$0xff] %vm1650, %v1123
      %2311 = vst.msk [vmem:[#allocation2 + $0x90] sm:$0xff] %vm1650, %v1124
      %2312 = vst.msk [vmem:[#allocation2 + $0x98] sm:$0xff] %vm1650, %v1125
      %2313 = vst.msk [vmem:[#allocation2 + $0xa0] sm:$0xff] %vm1650, %v1126
      %2314 = vst.msk [vmem:[#allocation2 + $0xa8] sm:$0xff] %vm1650, %v1127
      %2315 = vst.msk [vmem:[#allocation2 + $0xb0] sm:$0xff] %vm1650, %v1128
      %2316 = vst.msk [vmem:[#allocation2 + $0xb8] sm:$0xff] %vm1650, %v1129
      %2317 = vst.msk [vmem:[#allocation2 + $0xc0] sm:$0xff] %vm1650, %v1130
      %2318 = vst.msk [vmem:[#allocation2 + $0xc8] sm:$0xff] %vm1650, %v1131
      %2319 = vst.msk [vmem:[#allocation2 + $0xd0] sm:$0xff] %vm1650, %v1132
      %2320 = vst.msk [vmem:[#allocation2 + $0xd8] sm:$0xff] %vm1650, %v1133
      %2321 = vst.msk [vmem:[#allocation2 + $0xe0] sm:$0xff] %vm1650, %v1134
      %2322 = vst.msk [vmem:[#allocation2 + $0xe8] sm:$0xff] %vm1650, %v1135
      %2323 = vst.msk [vmem:[#allocation2 + $0xf0] sm:$0xff] %vm1650, %v1136
      %2324 = vst.msk [vmem:[#allocation2 + $0xf8] sm:$0xff] %vm1650, %v1137
      // Predicated region
      $region37: #{_self_attention_impl.1} parent=31 // pred_check
        %p2325 = pneg %p289
      $region38: #{_self_attention_impl.1} parent=31 // pred_check_branch
        %2327 = sbr.rel (%p2325) target = $region40
      $region39: #{_self_attention_impl.1} parent=31 // pred_region
        %v2328 = vld [vmem:[#allocation3] sm:$0xff]
        %v2329 = vld [vmem:[#allocation3 + $0x8] sm:$0xff]
        %v2330 = vld [vmem:[#allocation3 + $0x10] sm:$0xff]
        %v2331 = vld [vmem:[#allocation3 + $0x18] sm:$0xff]
        %v2332 = vld [vmem:[#allocation3 + $0x20] sm:$0xff]
        %v2333 = vld [vmem:[#allocation3 + $0x28] sm:$0xff]
        %v2334 = vld [vmem:[#allocation3 + $0x30] sm:$0xff]
        %v2335 = vld [vmem:[#allocation3 + $0x38] sm:$0xff]
        %v2336 = vld [vmem:[#allocation3 + $0x40] sm:$0xff]
        %v2337 = vld [vmem:[#allocation3 + $0x48] sm:$0xff]
        %v2338 = vld [vmem:[#allocation3 + $0x50] sm:$0xff]
        %v2339 = vld [vmem:[#allocation3 + $0x58] sm:$0xff]
        %v2340 = vld [vmem:[#allocation3 + $0x60] sm:$0xff]
        %v2341 = vld [vmem:[#allocation3 + $0x68] sm:$0xff]
        %v2342 = vld [vmem:[#allocation3 + $0x70] sm:$0xff]
        %v2343 = vld [vmem:[#allocation3 + $0x78] sm:$0xff]
        %v2344 = vld [vmem:[#allocation3 + $0x80] sm:$0xff]
        %v2345 = vld [vmem:[#allocation3 + $0x88] sm:$0xff]
        %v2346 = vld [vmem:[#allocation3 + $0x90] sm:$0xff]
        %v2347 = vld [vmem:[#allocation3 + $0x98] sm:$0xff]
        %v2348 = vld [vmem:[#allocation3 + $0xa0] sm:$0xff]
        %v2349 = vld [vmem:[#allocation3 + $0xa8] sm:$0xff]
        %v2350 = vld [vmem:[#allocation3 + $0xb0] sm:$0xff]
        %v2351 = vld [vmem:[#allocation3 + $0xb8] sm:$0xff]
        %v2352 = vld [vmem:[#allocation3 + $0xc0] sm:$0xff]
        %v2353 = vld [vmem:[#allocation3 + $0xc8] sm:$0xff]
        %v2354 = vld [vmem:[#allocation3 + $0xd0] sm:$0xff]
        %v2355 = vld [vmem:[#allocation3 + $0xd8] sm:$0xff]
        %v2356 = vld [vmem:[#allocation3 + $0xe0] sm:$0xff]
        %v2357 = vld [vmem:[#allocation3 + $0xe8] sm:$0xff]
        %v2358 = vld [vmem:[#allocation3 + $0xf0] sm:$0xff]
        %v2359 = vld [vmem:[#allocation3 + $0xf8] sm:$0xff]
        %v2360 = vrcp.pop %v2328
        %v2361 = vrcp.pop %v2329
        %v2362 = vrcp.pop %v2330
        %v2363 = vrcp.pop %v2331
        %v2364 = vrcp.pop %v2332
        %v2365 = vrcp.pop %v2333
        %v2366 = vrcp.pop %v2334
        %v2367 = vrcp.pop %v2335
        %v2368 = vrcp.pop %v2336
        %v2369 = vrcp.pop %v2337
        %v2370 = vrcp.pop %v2338
        %v2371 = vrcp.pop %v2339
        %v2372 = vrcp.pop %v2340
        %v2373 = vrcp.pop %v2341
        %v2374 = vrcp.pop %v2342
        %v2375 = vrcp.pop %v2343
        %v2376 = vrcp.pop %v2344
        %v2377 = vrcp.pop %v2345
        %v2378 = vrcp.pop %v2346
        %v2379 = vrcp.pop %v2347
        %v2380 = vrcp.pop %v2348
        %v2381 = vrcp.pop %v2349
        %v2382 = vrcp.pop %v2350
        %v2383 = vrcp.pop %v2351
        %v2384 = vrcp.pop %v2352
        %v2385 = vrcp.pop %v2353
        %v2386 = vrcp.pop %v2354
        %v2387 = vrcp.pop %v2355
        %v2388 = vrcp.pop %v2356
        %v2389 = vrcp.pop %v2357
        %v2390 = vrcp.pop %v2358
        %v2391 = vrcp.pop %v2359
        %v2392 = vld [vmem:[#allocation4] sm:$0xff]
        %v2393 = vld [vmem:[#allocation4 + $0x8] sm:$0xff]
        %v2394 = vld [vmem:[#allocation4 + $0x10] sm:$0xff]
        %v2395 = vld [vmem:[#allocation4 + $0x18] sm:$0xff]
        %v2396 = vld [vmem:[#allocation4 + $0x20] sm:$0xff]
        %v2397 = vld [vmem:[#allocation4 + $0x28] sm:$0xff]
        %v2398 = vld [vmem:[#allocation4 + $0x30] sm:$0xff]
        %v2399 = vld [vmem:[#allocation4 + $0x38] sm:$0xff]
        %v2400 = vld [vmem:[#allocation4 + $0x40] sm:$0xff]
        %v2401 = vld [vmem:[#allocation4 + $0x48] sm:$0xff]
        %v2402 = vld [vmem:[#allocation4 + $0x50] sm:$0xff]
        %v2403 = vld [vmem:[#allocation4 + $0x58] sm:$0xff]
        %v2404 = vld [vmem:[#allocation4 + $0x60] sm:$0xff]
        %v2405 = vld [vmem:[#allocation4 + $0x68] sm:$0xff]
        %v2406 = vld [vmem:[#allocation4 + $0x70] sm:$0xff]
        %v2407 = vld [vmem:[#allocation4 + $0x78] sm:$0xff]
        %v2408 = vld [vmem:[#allocation4 + $0x80] sm:$0xff]
        %v2409 = vld [vmem:[#allocation4 + $0x88] sm:$0xff]
        %v2410 = vld [vmem:[#allocation4 + $0x90] sm:$0xff]
        %v2411 = vld [vmem:[#allocation4 + $0x98] sm:$0xff]
        %v2412 = vld [vmem:[#allocation4 + $0xa0] sm:$0xff]
        %v2413 = vld [vmem:[#allocation4 + $0xa8] sm:$0xff]
        %v2414 = vld [vmem:[#allocation4 + $0xb0] sm:$0xff]
        %v2415 = vld [vmem:[#allocation4 + $0xb8] sm:$0xff]
        %v2416 = vld [vmem:[#allocation4 + $0xc0] sm:$0xff]
        %v2417 = vld [vmem:[#allocation4 + $0xc8] sm:$0xff]
        %v2418 = vld [vmem:[#allocation4 + $0xd0] sm:$0xff]
        %v2419 = vld [vmem:[#allocation4 + $0xd8] sm:$0xff]
        %v2420 = vld [vmem:[#allocation4 + $0xe0] sm:$0xff]
        %v2421 = vld [vmem:[#allocation4 + $0xe8] sm:$0xff]
        %v2422 = vld [vmem:[#allocation4 + $0xf0] sm:$0xff]
        %v2423 = vld [vmem:[#allocation4 + $0xf8] sm:$0xff]
        %2425 = vset.pattern.permute.xlu0 0
        %2426 = vperm.xlu0 %2425, %v2360
        %v2427 = vpop.permute.xlu0 %2426
        %2430 = vset.pattern.permute.xlu0 0
        %2431 = vperm.xlu0 %2430, %v2361
        %v2432 = vpop.permute.xlu0 %2431
        %2435 = vset.pattern.permute.xlu0 0
        %2436 = vperm.xlu0 %2435, %v2362
        %v2437 = vpop.permute.xlu0 %2436
        %2440 = vset.pattern.permute.xlu0 0
        %2441 = vperm.xlu0 %2440, %v2363
        %v2442 = vpop.permute.xlu0 %2441
        %2445 = vset.pattern.permute.xlu0 0
        %2446 = vperm.xlu0 %2445, %v2364
        %v2447 = vpop.permute.xlu0 %2446
        %2450 = vset.pattern.permute.xlu0 0
        %2451 = vperm.xlu0 %2450, %v2365
        %v2452 = vpop.permute.xlu0 %2451
        %2455 = vset.pattern.permute.xlu0 0
        %2456 = vperm.xlu0 %2455, %v2366
        %v2457 = vpop.permute.xlu0 %2456
        %2460 = vset.pattern.permute.xlu0 0
        %2461 = vperm.xlu0 %2460, %v2367
        %v2462 = vpop.permute.xlu0 %2461
        %2465 = vset.pattern.permute.xlu0 0
        %2466 = vperm.xlu0 %2465, %v2368
        %v2467 = vpop.permute.xlu0 %2466
        %2470 = vset.pattern.permute.xlu0 0
        %2471 = vperm.xlu0 %2470, %v2369
        %v2472 = vpop.permute.xlu0 %2471
        %2475 = vset.pattern.permute.xlu0 0
        %2476 = vperm.xlu0 %2475, %v2370
        %v2477 = vpop.permute.xlu0 %2476
        %2480 = vset.pattern.permute.xlu0 0
        %2481 = vperm.xlu0 %2480, %v2371
        %v2482 = vpop.permute.xlu0 %2481
        %2485 = vset.pattern.permute.xlu0 0
        %2486 = vperm.xlu0 %2485, %v2372
        %v2487 = vpop.permute.xlu0 %2486
        %2490 = vset.pattern.permute.xlu0 0
        %2491 = vperm.xlu0 %2490, %v2373
        %v2492 = vpop.permute.xlu0 %2491
        %2495 = vset.pattern.permute.xlu0 0
        %2496 = vperm.xlu0 %2495, %v2374
        %v2497 = vpop.permute.xlu0 %2496
        %2500 = vset.pattern.permute.xlu0 0
        %2501 = vperm.xlu0 %2500, %v2375
        %v2502 = vpop.permute.xlu0 %2501
        %2505 = vset.pattern.permute.xlu0 0
        %2506 = vperm.xlu0 %2505, %v2376
        %v2507 = vpop.permute.xlu0 %2506
        %2510 = vset.pattern.permute.xlu0 0
        %2511 = vperm.xlu0 %2510, %v2377
        %v2512 = vpop.permute.xlu0 %2511
        %2515 = vset.pattern.permute.xlu0 0
        %2516 = vperm.xlu0 %2515, %v2378
        %v2517 = vpop.permute.xlu0 %2516
        %2520 = vset.pattern.permute.xlu0 0
        %2521 = vperm.xlu0 %2520, %v2379
        %v2522 = vpop.permute.xlu0 %2521
        %2525 = vset.pattern.permute.xlu0 0
        %2526 = vperm.xlu0 %2525, %v2380
        %v2527 = vpop.permute.xlu0 %2526
        %2530 = vset.pattern.permute.xlu0 0
        %2531 = vperm.xlu0 %2530, %v2381
        %v2532 = vpop.permute.xlu0 %2531
        %2535 = vset.pattern.permute.xlu0 0
        %2536 = vperm.xlu0 %2535, %v2382
        %v2537 = vpop.permute.xlu0 %2536
        %2540 = vset.pattern.permute.xlu0 0
        %2541 = vperm.xlu0 %2540, %v2383
        %v2542 = vpop.permute.xlu0 %2541
        %2545 = vset.pattern.permute.xlu0 0
        %2546 = vperm.xlu0 %2545, %v2384
        %v2547 = vpop.permute.xlu0 %2546
        %2550 = vset.pattern.permute.xlu0 0
        %2551 = vperm.xlu0 %2550, %v2385
        %v2552 = vpop.permute.xlu0 %2551
        %2555 = vset.pattern.permute.xlu0 0
        %2556 = vperm.xlu0 %2555, %v2386
        %v2557 = vpop.permute.xlu0 %2556
        %2560 = vset.pattern.permute.xlu0 0
        %2561 = vperm.xlu0 %2560, %v2387
        %v2562 = vpop.permute.xlu0 %2561
        %2565 = vset.pattern.permute.xlu0 0
        %2566 = vperm.xlu0 %2565, %v2388
        %v2567 = vpop.permute.xlu0 %2566
        %2570 = vset.pattern.permute.xlu0 0
        %2571 = vperm.xlu0 %2570, %v2389
        %v2572 = vpop.permute.xlu0 %2571
        %2575 = vset.pattern.permute.xlu0 0
        %2576 = vperm.xlu0 %2575, %v2390
        %v2577 = vpop.permute.xlu0 %2576
        %2580 = vset.pattern.permute.xlu0 0
        %2581 = vperm.xlu0 %2580, %v2391
        %v2582 = vpop.permute.xlu0 %2581
        %v2584 = vmul.f32 %v2392, %v2427
        %v2585 = vmul.f32 %v2393, %v2432
        %v2586 = vmul.f32 %v2394, %v2437
        %v2587 = vmul.f32 %v2395, %v2442
        %v2588 = vmul.f32 %v2396, %v2447
        %v2589 = vmul.f32 %v2397, %v2452
        %v2590 = vmul.f32 %v2398, %v2457
        %v2591 = vmul.f32 %v2399, %v2462
        %v2592 = vmul.f32 %v2400, %v2467
        %v2593 = vmul.f32 %v2401, %v2472
        %v2594 = vmul.f32 %v2402, %v2477
        %v2595 = vmul.f32 %v2403, %v2482
        %v2596 = vmul.f32 %v2404, %v2487
        %v2597 = vmul.f32 %v2405, %v2492
        %v2598 = vmul.f32 %v2406, %v2497
        %v2599 = vmul.f32 %v2407, %v2502
        %v2600 = vmul.f32 %v2408, %v2507
        %v2601 = vmul.f32 %v2409, %v2512
        %v2602 = vmul.f32 %v2410, %v2517
        %v2603 = vmul.f32 %v2411, %v2522
        %v2604 = vmul.f32 %v2412, %v2527
        %v2605 = vmul.f32 %v2413, %v2532
        %v2606 = vmul.f32 %v2414, %v2537
        %v2607 = vmul.f32 %v2415, %v2542
        %v2608 = vmul.f32 %v2416, %v2547
        %v2609 = vmul.f32 %v2417, %v2552
        %v2610 = vmul.f32 %v2418, %v2557
        %v2611 = vmul.f32 %v2419, %v2562
        %v2612 = vmul.f32 %v2420, %v2567
        %v2613 = vmul.f32 %v2421, %v2572
        %v2614 = vmul.f32 %v2422, %v2577
        %v2615 = vmul.f32 %v2423, %v2582
        %2616 = vst.msk [vmem:[%s287] sm:$0xff] %vm487, %v2584
        %2617 = vst.msk [vmem:[%s287 + $0x8] sm:$0xff] %vm487, %v2585
        %2618 = vst.msk [vmem:[%s287 + $0x10] sm:$0xff] %vm487, %v2586
        %2619 = vst.msk [vmem:[%s287 + $0x18] sm:$0xff] %vm487, %v2587
        %2620 = vst.msk [vmem:[%s287 + $0x20] sm:$0xff] %vm487, %v2588
        %2621 = vst.msk [vmem:[%s287 + $0x28] sm:$0xff] %vm487, %v2589
        %2622 = vst.msk [vmem:[%s287 + $0x30] sm:$0xff] %vm487, %v2590
        %2623 = vst.msk [vmem:[%s287 + $0x38] sm:$0xff] %vm487, %v2591
        %2624 = vst.msk [vmem:[%s287 + $0x40] sm:$0xff] %vm487, %v2592
        %2625 = vst.msk [vmem:[%s287 + $0x48] sm:$0xff] %vm487, %v2593
        %2626 = vst.msk [vmem:[%s287 + $0x50] sm:$0xff] %vm487, %v2594
        %2627 = vst.msk [vmem:[%s287 + $0x58] sm:$0xff] %vm487, %v2595
        %2628 = vst.msk [vmem:[%s287 + $0x60] sm:$0xff] %vm487, %v2596
        %2629 = vst.msk [vmem:[%s287 + $0x68] sm:$0xff] %vm487, %v2597
        %2630 = vst.msk [vmem:[%s287 + $0x70] sm:$0xff] %vm487, %v2598
        %2631 = vst.msk [vmem:[%s287 + $0x78] sm:$0xff] %vm487, %v2599
        %2632 = vst.msk [vmem:[%s287 + $0x80] sm:$0xff] %vm487, %v2600
        %2633 = vst.msk [vmem:[%s287 + $0x88] sm:$0xff] %vm487, %v2601
        %2634 = vst.msk [vmem:[%s287 + $0x90] sm:$0xff] %vm487, %v2602
        %2635 = vst.msk [vmem:[%s287 + $0x98] sm:$0xff] %vm487, %v2603
        %2636 = vst.msk [vmem:[%s287 + $0xa0] sm:$0xff] %vm487, %v2604
        %2637 = vst.msk [vmem:[%s287 + $0xa8] sm:$0xff] %vm487, %v2605
        %2638 = vst.msk [vmem:[%s287 + $0xb0] sm:$0xff] %vm487, %v2606
        %2639 = vst.msk [vmem:[%s287 + $0xb8] sm:$0xff] %vm487, %v2607
        %2640 = vst.msk [vmem:[%s287 + $0xc0] sm:$0xff] %vm487, %v2608
        %2641 = vst.msk [vmem:[%s287 + $0xc8] sm:$0xff] %vm487, %v2609
        %2642 = vst.msk [vmem:[%s287 + $0xd0] sm:$0xff] %vm487, %v2610
        %2643 = vst.msk [vmem:[%s287 + $0xd8] sm:$0xff] %vm487, %v2611
        %2644 = vst.msk [vmem:[%s287 + $0xe0] sm:$0xff] %vm487, %v2612
        %2645 = vst.msk [vmem:[%s287 + $0xe8] sm:$0xff] %vm487, %v2613
        %2646 = vst.msk [vmem:[%s287 + $0xf0] sm:$0xff] %vm487, %v2614
        %2647 = vst.msk [vmem:[%s287 + $0xf8] sm:$0xff] %vm487, %v2615
      $region40: #{_self_attention_impl.1} parent=31 // pred_fallthru
        _
      %s2648 = smul.u32 16, %s20
      %p2649 = scmp.lt.s32.totalorder %s19, 1
      %s2650 = scalar_select %p2649, %s19, 1
      %p2651 = scmp.lt.s32.totalorder %s2648, 15
      %s2652 = scalar_select %p2651, %s2648, 15
      %s2653 = smul.addr %s2650, 32
      %s2654 = sadd.s32 %s2652, %s2653
      %s2655 = smul.addr %s2654, 8
      %s2656 = scalar_lea.vmem %s3, %s2655
      // Predicated region
      $region41: #{_self_attention_impl.1} parent=31 // pred_check
        %p2657 = pneg %p137
      $region42: #{_self_attention_impl.1} parent=31 // pred_check_branch
        %2659 = sbr.rel (%p2657) target = $region44
      $region43: #{_self_attention_impl.1} parent=31 // pred_region
        %s2660 = smul.u32 16, %s20
      $region44: #{_self_attention_impl.1} parent=31 // pred_fallthru
        _
    $region32: #{_self_attention_impl.1} parent=5 // pred_fallthru
      _
    %p2661 = scmp.le.s32.totalorder 2, %s9
    // Predicated region
    $region45: #{_self_attention_impl.1} parent=5 // pred_check
      %p2662 = pneg %p2661
    $region46: #{_self_attention_impl.1} parent=5 // pred_check_branch
      %2664 = sbr.rel (%p2662) target = $region48
    $region47: #{_self_attention_impl.1} parent=5 // pred_region
      %s2665 = ssub.s32 %s9, 2
      // Predicated region
      $region49: #{_self_attention_impl.1} parent=47 // pred_check
        %p2666 = pneg %p143
      $region50: #{_self_attention_impl.1} parent=47 // pred_check_branch
        %2668 = sbr.rel (%p2666) target = $region52
      $region51: #{_self_attention_impl.1} parent=47 // pred_region
        %s2669 = smul.u32 16, %s23
        %p2670 = scmp.lt.s32.totalorder %s22, 1
        %s2671 = scalar_select %p2670, %s22, 1
        %p2672 = scmp.lt.s32.totalorder %s2669, 15
        %s2673 = scalar_select %p2672, %s2669, 15
        %s2674 = smul.addr %s2671, 32
        %s2675 = sadd.s32 %s2673, %s2674
        %s2676 = smul.addr %s2675, 8
        %s2677 = scalar_lea.vmem %s3, %s2676
      $region52: #{_self_attention_impl.1} parent=47 // pred_fallthru
        _
    $region48: #{_self_attention_impl.1} parent=5 // pred_fallthru
      _
  $region6: #{_self_attention_impl.1} parent=0 // loop_footer
    %s13 = sadd.s32 1, %s9
  $region7: #{_self_attention_impl.1} parent=0 // loop_footer_branch
    %8 = sbr.rel target = $region3
  $region8: #{_self_attention_impl.1} parent=0 // loop_exit
    _

</llo_original>
